<compile_context>
chip_gen: v5e
topology: v5e:2x2
jax: 0.10.0
libtpu: 0.0.40
codegen_flags: <defaults>
</compile_context>

<pallas_src>
import functools

import jax
import jax.numpy as jnp
from jax.experimental import pallas as pl
from jax.experimental.pallas import tpu as pltpu


# For an output row r = 2i + pr, the 3x3 conv over the upsampled image reads upsampled
# rows r-1, r, r+1, i.e. x rows (r - 1 + a) // 2 for tap a in {0,1,2}.  This maps tap a
# to input-row offset dy (identical table for columns / dx / pc):
_PARITY_TAPS = {
    0: {-1: (0,), 0: (1, 2)},   # even output row: tap 0 -> row i-1, taps 1,2 -> row i
    1: {0: (0, 1), 1: (2,)},    # odd  output row: taps 0,1 -> row i, tap 2 -> row i+1
}
_SHIFTS = tuple((dy, dx) for dy in (-1, 0, 1) for dx in (-1, 0, 1))


def _build_shift_weights(w_hwio):
    """Fold upsample2x + conv3x3 weights into 9 per-shift (Cin, 4*Cout) matrices."""
    cin, cout = int(w_hwio.shape[2]), int(w_hwio.shape[3])
    shift_blocks = []
    for dy, dx in _SHIFTS:
        parity_cols = []
        # parity order (pr, pc) = (0,0),(0,1),(1,0),(1,1) -> lane offset (2*pr+pc)*Cout
        for pr in (0, 1):
            for pc in (0, 1):
                a_taps = _PARITY_TAPS[pr].get(dy, ())
                b_taps = _PARITY_TAPS[pc].get(dx, ())
                blk = jnp.zeros((cin, cout), jnp.float32)
                for ky in a_taps:
                    for kx in b_taps:
                        blk = blk + w_hwio[ky, kx].astype(jnp.float32)
                parity_cols.append(blk)
        shift_blocks.append(jnp.concatenate(parity_cols, axis=1))   # (Cin, 4*Cout)
    return jnp.concatenate(shift_blocks, axis=0)                    # (9*Cin, 4*Cout)


def _upblock_kernel(x_ref, w_ref, b_ref, o_ref, *, width, tile_rows, pad_rows, cin, cout):
    # x_ref: (H*W + 2*pad_rows, Cin)  zero-padded flat input of one image (VMEM).
    # w_ref: (9*Cin, 4*Cout)          parity-combined per-shift weights.
    # b_ref: (1, 4*Cout)              bias tiled over the 4 parities.
    # o_ref: (tile_rows, 4*Cout)      lane-dense output rows for this (batch, row-tile).
    m0 = pl.program_id(1) * tile_rows          # first flat output row of this tile

    # Column index j = m % width (tile_rows is a multiple of width, so local == global).
    lm = jax.lax.broadcasted_iota(jnp.int32, (tile_rows, 1), 0)
    if (width & (width - 1)) == 0:
        col = jnp.bitwise_and(lm, width - 1)
    else:
        col = lm % width
    mask_left = jnp.where(col == 0, 0.0, 1.0).astype(jnp.float32)    # kill wrap for dx=-1
    mask_right = jnp.where(col == width - 1, 0.0, 1.0).astype(jnp.float32)  # dx=+1

    aligned = (width % 8 == 0) and (tile_rows % 8 == 0) and (pad_rows % 8 == 0)

    acc = jnp.zeros((tile_rows, 4 * cout), jnp.float32)
    for s_idx, (dy, dx) in enumerate(_SHIFTS):
        start = m0 + pad_rows + dy * width + dx
        if aligned and dx == 0:
            start = pl.multiple_of(start, 8)
        op = x_ref[pl.ds(start, tile_rows), :]                        # (tile_rows, Cin)
        if dx == -1:
            op = op * mask_left
        elif dx == 1:
            op = op * mask_right
        wslab = w_ref[s_idx * cin:(s_idx + 1) * cin, :]               # (Cin, 4*Cout)
        acc = acc + jnp.dot(op, wslab, preferred_element_type=jnp.float32)

    o_ref[...] = (acc + b_ref[...]).astype(o_ref.dtype)


def _pick_row_tiling(h, w, max_tile_rows=2048):
    """Split each image's H*W output rows into row-tiles (megacore + VMEM bound)."""
    row_tiles, tile_rows = 1, h * w
    for cand in (2, 4, 8, 16, 32):
        if h % cand:
            continue
        tr = (h // cand) * w
        if tr % 8:
            continue
        row_tiles, tile_rows = cand, tr
        if tr <= max_tile_rows:
            break
    return row_tiles, tile_rows


def upblock_forward(x_nchw, w_oihw, bias):
    """UpBlock forward: 2x nearest upsample + Conv2d(3x3, stride 1, pad 1). NCHW in/out."""
    batch, cin, h, w = x_nchw.shape
    cout = int(w_oihw.shape[0])
    s = h * w
    pad_rows = ((w + 1 + 7) // 8) * 8          # >= w+1 (covers +/-(w+1) flat shifts), aligned

    row_tiles, tile_rows = _pick_row_tiling(h, w)

    # Cheap prep on the *un-upsampled* input (no 4x tensor, no 9x im2col in HBM).
    x_flat = jnp.transpose(x_nchw, (0, 2, 3, 1)).astype(jnp.float32).reshape(batch, s, cin)
    x_pad = jnp.pad(x_flat, ((0, 0), (pad_rows, pad_rows), (0, 0)))
    w_hwio = jnp.transpose(w_oihw, (2, 3, 1, 0)).astype(jnp.float32)   # OIHW -> HWIO
    w_shift = _build_shift_weights(w_hwio)                             # (9*Cin, 4*Cout)
    bias4 = jnp.tile(bias.astype(jnp.float32), 4).reshape(1, 4 * cout)

    kernel = functools.partial(
        _upblock_kernel, width=w, tile_rows=tile_rows, pad_rows=pad_rows,
        cin=cin, cout=cout)

    out_flat = pl.pallas_call(
        kernel,
        grid=(batch, row_tiles),
        in_specs=[
            pl.BlockSpec((None, s + 2 * pad_rows, cin), lambda b, r: (b, 0, 0)),
            pl.BlockSpec((9 * cin, 4 * cout), lambda b, r: (0, 0)),
            pl.BlockSpec((1, 4 * cout), lambda b, r: (0, 0)),
        ],
        out_specs=pl.BlockSpec((None, tile_rows, 4 * cout), lambda b, r: (b, r, 0)),
        out_shape=jax.ShapeDtypeStruct((batch, s, 4 * cout), jnp.float32),
        compiler_params=pltpu.CompilerParams(
            dimension_semantics=("parallel", "parallel")),
    )(x_pad, w_shift, bias4)

    # Parity de-interleave + NHWC->NCHW, absorbed into the single output transpose.
    y = out_flat.reshape(batch, h, w, 2, 2, cout)        # [b, i, j, pr, pc, c]
    y = jnp.transpose(y, (0, 5, 1, 3, 2, 4))             # [b, c, i, pr, j, pc]
    return y.reshape(batch, cout, 2 * h, 2 * w)


if __name__ == "__main__":
    key = jax.random.PRNGKey(0)
    k_x, k_w, k_b = jax.random.split(key, 3)

    B, Cin, H, W = 2, 32, 16, 16          # x: [B, C, H, W] like PyTorch
    Cout = 64
    x = jax.random.normal(k_x, (B, Cin, H, W), jnp.float32)
    w_oihw = 0.05 * jax.random.normal(k_w, (Cout, Cin, 3, 3), jnp.float32)
    bias = 0.05 * jax.random.normal(k_b, (Cout,), jnp.float32)

    out = jax.jit(upblock_forward)(x, w_oihw, bias)
    out = jax.block_until_ready(out)

    # Pure-JAX reference: nearest 2x upsample + 3x3 'same' conv (NCHW, like PyTorch).
    up = jnp.repeat(jnp.repeat(x, 2, axis=2), 2, axis=3)
    ref = jax.lax.conv_general_dilated(
        up, w_oihw, window_strides=(1, 1), padding=((1, 1), (1, 1)),
        dimension_numbers=("NCHW", "OIHW", "NCHW"),
        precision=jax.lax.Precision.HIGHEST) + bias.reshape(1, Cout, 1, 1)

    assert out.shape == (B, Cout, 2 * H, 2 * W), out.shape
    assert out.dtype == jnp.float32
    assert bool(jnp.all(jnp.isfinite(out)))
    err = float(jnp.max(jnp.abs(out - ref)) / (jnp.max(jnp.abs(ref)) + 1e-6))
    assert err < 1e-2, f"kernel/reference mismatch: rel max err {err}"
    print("KERNEL_OK")
</pallas_src>

<mosaic_0001>
module attributes {stable_mosaic.version = 11 : i64} {
  func.func @_upblock_kernel(%arg0: i32, %arg1: i32, %arg2: memref<1x304x32xf32, #tpu.memory_space<vmem>>, %arg3: memref<288x256xf32, #tpu.memory_space<vmem>>, %arg4: memref<1x256xf32, #tpu.memory_space<vmem>>, %arg5: memref<1x128x256xf32, #tpu.memory_space<vmem>>) attributes {dimension_semantics = [#tpu.dimension_semantics<parallel>, #tpu.dimension_semantics<parallel>], iteration_bounds = array<i64: 2, 2>, scalar_prefetch = 0 : i64, scratch_operands = 0 : i64, tpu.core_type = #tpu.core_type<tc>, window_params = [{transform_indices = @transform_0, window_bounds = array<i64: 1, 304, 32>}, {pipeline_mode = #tpu.pipeline_mode<synchronous>, transform_indices = @transform_1, window_bounds = array<i64: 288, 256>}, {pipeline_mode = #tpu.pipeline_mode<synchronous>, transform_indices = @transform_2, window_bounds = array<i64: 1, 256>}, {transform_indices = @transform_3, window_bounds = array<i64: 1, 128, 256>}]} {
    %c128_i32 = arith.constant 128 : i32
    %0 = arith.muli %arg1, %c128_i32 : i32
    %1 = tpu.iota {dimensions = array<i32: 0>} : vector<128x1xi32>
    %c15_i32 = arith.constant 15 : i32
    %2 = vector.broadcast %c15_i32 : i32 to vector<128x1xi32>
    %3 = arith.andi %1, %2 : vector<128x1xi32>
    %c0_i32 = arith.constant 0 : i32
    %4 = vector.broadcast %c0_i32 : i32 to vector<128x1xi32>
    %5 = arith.cmpi eq, %3, %4 : vector<128x1xi32>
    %cst = arith.constant 0.000000e+00 : f32
    %cst_0 = arith.constant 1.000000e+00 : f32
    %6 = vector.broadcast %cst : f32 to vector<128x1xf32>
    %7 = vector.broadcast %cst_0 : f32 to vector<128x1xf32>
    %8 = arith.select %5, %6, %7 : vector<128x1xi1>, vector<128x1xf32>
    %c15_i32_1 = arith.constant 15 : i32
    %9 = vector.broadcast %c15_i32_1 : i32 to vector<128x1xi32>
    %10 = arith.cmpi eq, %3, %9 : vector<128x1xi32>
    %cst_2 = arith.constant 0.000000e+00 : f32
    %cst_3 = arith.constant 1.000000e+00 : f32
    %11 = vector.broadcast %cst_2 : f32 to vector<128x1xf32>
    %12 = vector.broadcast %cst_3 : f32 to vector<128x1xf32>
    %13 = arith.select %10, %11, %12 : vector<128x1xi1>, vector<128x1xf32>
    %cst_4 = arith.constant 0.000000e+00 : f32
    %14 = vector.broadcast %cst_4 : f32 to vector<128x256xf32>
    %c24_i32 = arith.constant 24 : i32
    %15 = arith.addi %0, %c24_i32 : i32
    %c-16_i32 = arith.constant -16 : i32
    %16 = arith.addi %15, %c-16_i32 : i32
    %c-1_i32 = arith.constant -1 : i32
    %17 = arith.addi %16, %c-1_i32 : i32
    %c0 = arith.constant 0 : index
    %18 = arith.index_cast %17 : i32 to index
    %c0_5 = arith.constant 0 : index
    %19 = vector.load %arg2[%c0, %18, %c0_5] : memref<1x304x32xf32, #tpu.memory_space<vmem>>, vector<1x128x32xf32>
    %20 = vector.shape_cast %19 : vector<1x128x32xf32> to vector<128x32xf32>
    %21 = vector.broadcast %8 : vector<128x1xf32> to vector<128x32xf32>
    %22 = arith.mulf %20, %21 : vector<128x32xf32>
    %c0_6 = arith.constant 0 : index
    %c0_7 = arith.constant 0 : index
    %23 = vector.load %arg3[%c0_6, %c0_7] : memref<288x256xf32, #tpu.memory_space<vmem>>, vector<32x256xf32>
    %cst_8 = arith.constant dense<0.000000e+00> : vector<128x256xf32>
    %24 = tpu.matmul %22, %23, %cst_8 {dimension_numbers = #tpu.dot_dimension_numbers<[1], [0], [0], [1], [0, 0, 1, 1], [], []>} : vector<128x32xf32>, vector<32x256xf32>, vector<128x256xf32> -> vector<128x256xf32>
    %25 = arith.addf %14, %24 : vector<128x256xf32>
    %c24_i32_9 = arith.constant 24 : i32
    %26 = arith.addi %0, %c24_i32_9 : i32
    %c-16_i32_10 = arith.constant -16 : i32
    %27 = arith.addi %26, %c-16_i32_10 : i32
    %c0_i32_11 = arith.constant 0 : i32
    %28 = arith.addi %27, %c0_i32_11 : i32
    %29 = tpu.assume_multiple %28, 8 : i32
    %c0_12 = arith.constant 0 : index
    %30 = arith.index_cast %29 : i32 to index
    %c0_13 = arith.constant 0 : index
    %31 = vector.load %arg2[%c0_12, %30, %c0_13] : memref<1x304x32xf32, #tpu.memory_space<vmem>>, vector<1x128x32xf32>
    %32 = vector.shape_cast %31 : vector<1x128x32xf32> to vector<128x32xf32>
    %c32 = arith.constant 32 : index
    %c0_14 = arith.constant 0 : index
    %33 = vector.load %arg3[%c32, %c0_14] : memref<288x256xf32, #tpu.memory_space<vmem>>, vector<32x256xf32>
    %cst_15 = arith.constant dense<0.000000e+00> : vector<128x256xf32>
    %34 = tpu.matmul %32, %33, %cst_15 {dimension_numbers = #tpu.dot_dimension_numbers<[1], [0], [0], [1], [0, 0, 1, 1], [], []>} : vector<128x32xf32>, vector<32x256xf32>, vector<128x256xf32> -> vector<128x256xf32>
    %35 = arith.addf %25, %34 : vector<128x256xf32>
    %c24_i32_16 = arith.constant 24 : i32
    %36 = arith.addi %0, %c24_i32_16 : i32
    %c-16_i32_17 = arith.constant -16 : i32
    %37 = arith.addi %36, %c-16_i32_17 : i32
    %c1_i32 = arith.constant 1 : i32
    %38 = arith.addi %37, %c1_i32 : i32
    %c0_18 = arith.constant 0 : index
    %39 = arith.index_cast %38 : i32 to index
    %c0_19 = arith.constant 0 : index
    %40 = vector.load %arg2[%c0_18, %39, %c0_19] : memref<1x304x32xf32, #tpu.memory_space<vmem>>, vector<1x128x32xf32>
    %41 = vector.shape_cast %40 : vector<1x128x32xf32> to vector<128x32xf32>
    %42 = vector.broadcast %13 : vector<128x1xf32> to vector<128x32xf32>
    %43 = arith.mulf %41, %42 : vector<128x32xf32>
    %c64 = arith.constant 64 : index
    %c0_20 = arith.constant 0 : index
    %44 = vector.load %arg3[%c64, %c0_20] : memref<288x256xf32, #tpu.memory_space<vmem>>, vector<32x256xf32>
    %cst_21 = arith.constant dense<0.000000e+00> : vector<128x256xf32>
    %45 = tpu.matmul %43, %44, %cst_21 {dimension_numbers = #tpu.dot_dimension_numbers<[1], [0], [0], [1], [0, 0, 1, 1], [], []>} : vector<128x32xf32>, vector<32x256xf32>, vector<128x256xf32> -> vector<128x256xf32>
    %46 = arith.addf %35, %45 : vector<128x256xf32>
    %c24_i32_22 = arith.constant 24 : i32
    %47 = arith.addi %0, %c24_i32_22 : i32
    %c0_i32_23 = arith.constant 0 : i32
    %48 = arith.addi %47, %c0_i32_23 : i32
    %c-1_i32_24 = arith.constant -1 : i32
    %49 = arith.addi %48, %c-1_i32_24 : i32
    %c0_25 = arith.constant 0 : index
    %50 = arith.index_cast %49 : i32 to index
    %c0_26 = arith.constant 0 : index
    %51 = vector.load %arg2[%c0_25, %50, %c0_26] : memref<1x304x32xf32, #tpu.memory_space<vmem>>, vector<1x128x32xf32>
    %52 = vector.shape_cast %51 : vector<1x128x32xf32> to vector<128x32xf32>
    %53 = vector.broadcast %8 : vector<128x1xf32> to vector<128x32xf32>
    %54 = arith.mulf %52, %53 : vector<128x32xf32>
    %c96 = arith.constant 96 : index
    %c0_27 = arith.constant 0 : index
    %55 = vector.load %arg3[%c96, %c0_27] : memref<288x256xf32, #tpu.memory_space<vmem>>, vector<32x256xf32>
    %cst_28 = arith.constant dense<0.000000e+00> : vector<128x256xf32>
    %56 = tpu.matmul %54, %55, %cst_28 {dimension_numbers = #tpu.dot_dimension_numbers<[1], [0], [0], [1], [0, 0, 1, 1], [], []>} : vector<128x32xf32>, vector<32x256xf32>, vector<128x256xf32> -> vector<128x256xf32>
    %57 = arith.addf %46, %56 : vector<128x256xf32>
    %c24_i32_29 = arith.constant 24 : i32
    %58 = arith.addi %0, %c24_i32_29 : i32
    %c0_i32_30 = arith.constant 0 : i32
    %59 = arith.addi %58, %c0_i32_30 : i32
    %c0_i32_31 = arith.constant 0 : i32
    %60 = arith.addi %59, %c0_i32_31 : i32
    %61 = tpu.assume_multiple %60, 8 : i32
    %c0_32 = arith.constant 0 : index
    %62 = arith.index_cast %61 : i32 to index
    %c0_33 = arith.constant 0 : index
    %63 = vector.load %arg2[%c0_32, %62, %c0_33] : memref<1x304x32xf32, #tpu.memory_space<vmem>>, vector<1x128x32xf32>
    %64 = vector.shape_cast %63 : vector<1x128x32xf32> to vector<128x32xf32>
    %c128 = arith.constant 128 : index
    %c0_34 = arith.constant 0 : index
    %65 = vector.load %arg3[%c128, %c0_34] : memref<288x256xf32, #tpu.memory_space<vmem>>, vector<32x256xf32>
    %cst_35 = arith.constant dense<0.000000e+00> : vector<128x256xf32>
    %66 = tpu.matmul %64, %65, %cst_35 {dimension_numbers = #tpu.dot_dimension_numbers<[1], [0], [0], [1], [0, 0, 1, 1], [], []>} : vector<128x32xf32>, vector<32x256xf32>, vector<128x256xf32> -> vector<128x256xf32>
    %67 = arith.addf %57, %66 : vector<128x256xf32>
    %c24_i32_36 = arith.constant 24 : i32
    %68 = arith.addi %0, %c24_i32_36 : i32
    %c0_i32_37 = arith.constant 0 : i32
    %69 = arith.addi %68, %c0_i32_37 : i32
    %c1_i32_38 = arith.constant 1 : i32
    %70 = arith.addi %69, %c1_i32_38 : i32
    %c0_39 = arith.constant 0 : index
    %71 = arith.index_cast %70 : i32 to index
    %c0_40 = arith.constant 0 : index
    %72 = vector.load %arg2[%c0_39, %71, %c0_40] : memref<1x304x32xf32, #tpu.memory_space<vmem>>, vector<1x128x32xf32>
    %73 = vector.shape_cast %72 : vector<1x128x32xf32> to vector<128x32xf32>
    %74 = vector.broadcast %13 : vector<128x1xf32> to vector<128x32xf32>
    %75 = arith.mulf %73, %74 : vector<128x32xf32>
    %c160 = arith.constant 160 : index
    %c0_41 = arith.constant 0 : index
    %76 = vector.load %arg3[%c160, %c0_41] : memref<288x256xf32, #tpu.memory_space<vmem>>, vector<32x256xf32>
    %cst_42 = arith.constant dense<0.000000e+00> : vector<128x256xf32>
    %77 = tpu.matmul %75, %76, %cst_42 {dimension_numbers = #tpu.dot_dimension_numbers<[1], [0], [0], [1], [0, 0, 1, 1], [], []>} : vector<128x32xf32>, vector<32x256xf32>, vector<128x256xf32> -> vector<128x256xf32>
    %78 = arith.addf %67, %77 : vector<128x256xf32>
    %c24_i32_43 = arith.constant 24 : i32
    %79 = arith.addi %0, %c24_i32_43 : i32
    %c16_i32 = arith.constant 16 : i32
    %80 = arith.addi %79, %c16_i32 : i32
    %c-1_i32_44 = arith.constant -1 : i32
    %81 = arith.addi %80, %c-1_i32_44 : i32
    %c0_45 = arith.constant 0 : index
    %82 = arith.index_cast %81 : i32 to index
    %c0_46 = arith.constant 0 : index
    %83 = vector.load %arg2[%c0_45, %82, %c0_46] : memref<1x304x32xf32, #tpu.memory_space<vmem>>, vector<1x128x32xf32>
    %84 = vector.shape_cast %83 : vector<1x128x32xf32> to vector<128x32xf32>
    %85 = vector.broadcast %8 : vector<128x1xf32> to vector<128x32xf32>
    %86 = arith.mulf %84, %85 : vector<128x32xf32>
    %c192 = arith.constant 192 : index
    %c0_47 = arith.constant 0 : index
    %87 = vector.load %arg3[%c192, %c0_47] : memref<288x256xf32, #tpu.memory_space<vmem>>, vector<32x256xf32>
    %cst_48 = arith.constant dense<0.000000e+00> : vector<128x256xf32>
    %88 = tpu.matmul %86, %87, %cst_48 {dimension_numbers = #tpu.dot_dimension_numbers<[1], [0], [0], [1], [0, 0, 1, 1], [], []>} : vector<128x32xf32>, vector<32x256xf32>, vector<128x256xf32> -> vector<128x256xf32>
    %89 = arith.addf %78, %88 : vector<128x256xf32>
    %c24_i32_49 = arith.constant 24 : i32
    %90 = arith.addi %0, %c24_i32_49 : i32
    %c16_i32_50 = arith.constant 16 : i32
    %91 = arith.addi %90, %c16_i32_50 : i32
    %c0_i32_51 = arith.constant 0 : i32
    %92 = arith.addi %91, %c0_i32_51 : i32
    %93 = tpu.assume_multiple %92, 8 : i32
    %c0_52 = arith.constant 0 : index
    %94 = arith.index_cast %93 : i32 to index
    %c0_53 = arith.constant 0 : index
    %95 = vector.load %arg2[%c0_52, %94, %c0_53] : memref<1x304x32xf32, #tpu.memory_space<vmem>>, vector<1x128x32xf32>
    %96 = vector.shape_cast %95 : vector<1x128x32xf32> to vector<128x32xf32>
    %c224 = arith.constant 224 : index
    %c0_54 = arith.constant 0 : index
    %97 = vector.load %arg3[%c224, %c0_54] : memref<288x256xf32, #tpu.memory_space<vmem>>, vector<32x256xf32>
    %cst_55 = arith.constant dense<0.000000e+00> : vector<128x256xf32>
    %98 = tpu.matmul %96, %97, %cst_55 {dimension_numbers = #tpu.dot_dimension_numbers<[1], [0], [0], [1], [0, 0, 1, 1], [], []>} : vector<128x32xf32>, vector<32x256xf32>, vector<128x256xf32> -> vector<128x256xf32>
    %99 = arith.addf %89, %98 : vector<128x256xf32>
    %c24_i32_56 = arith.constant 24 : i32
    %100 = arith.addi %0, %c24_i32_56 : i32
    %c16_i32_57 = arith.constant 16 : i32
    %101 = arith.addi %100, %c16_i32_57 : i32
    %c1_i32_58 = arith.constant 1 : i32
    %102 = arith.addi %101, %c1_i32_58 : i32
    %c0_59 = arith.constant 0 : index
    %103 = arith.index_cast %102 : i32 to index
    %c0_60 = arith.constant 0 : index
    %104 = vector.load %arg2[%c0_59, %103, %c0_60] : memref<1x304x32xf32, #tpu.memory_space<vmem>>, vector<1x128x32xf32>
    %105 = vector.shape_cast %104 : vector<1x128x32xf32> to vector<128x32xf32>
    %106 = vector.broadcast %13 : vector<128x1xf32> to vector<128x32xf32>
    %107 = arith.mulf %105, %106 : vector<128x32xf32>
    %c256 = arith.constant 256 : index
    %c0_61 = arith.constant 0 : index
    %108 = vector.load %arg3[%c256, %c0_61] : memref<288x256xf32, #tpu.memory_space<vmem>>, vector<32x256xf32>
    %cst_62 = arith.constant dense<0.000000e+00> : vector<128x256xf32>
    %109 = tpu.matmul %107, %108, %cst_62 {dimension_numbers = #tpu.dot_dimension_numbers<[1], [0], [0], [1], [0, 0, 1, 1], [], []>} : vector<128x32xf32>, vector<32x256xf32>, vector<128x256xf32> -> vector<128x256xf32>
    %110 = arith.addf %99, %109 : vector<128x256xf32>
    %c0_63 = arith.constant 0 : index
    %c0_64 = arith.constant 0 : index
    %111 = vector.load %arg4[%c0_63, %c0_64] : memref<1x256xf32, #tpu.memory_space<vmem>>, vector<1x256xf32>
    %112 = vector.broadcast %111 : vector<1x256xf32> to vector<128x256xf32>
    %113 = arith.addf %110, %112 : vector<128x256xf32>
    %c0_65 = arith.constant 0 : index
    %c0_66 = arith.constant 0 : index
    %c0_67 = arith.constant 0 : index
    %114 = vector.load %arg5[%c0_65, %c0_66, %c0_67] : memref<1x128x256xf32, #tpu.memory_space<vmem>>, vector<1x128x256xf32>
    %115 = vector.shape_cast %114 : vector<1x128x256xf32> to vector<128x256xf32>
    %116 = vector.shape_cast %113 : vector<128x256xf32> to vector<1x128x256xf32>
    tpu.vector_store %arg5[%c0_65, %c0_66, %c0_67], %116 {strides = array<i32>} : memref<1x128x256xf32, #tpu.memory_space<vmem>>, vector<1x128x256xf32>,
    return
  }
  func.func @transform_0(%arg0: i32, %arg1: i32) -> (i32, i32, i32) {
    %c0_i32 = arith.constant 0 : i32
    %c0_i32_0 = arith.constant 0 : i32
    %c0_i32_1 = arith.constant 0 : i32
    return %arg0, %c0_i32, %c0_i32_0 : i32, i32, i32
  }
  func.func @transform_1(%arg0: i32, %arg1: i32) -> (i32, i32) {
    %c0_i32 = arith.constant 0 : i32
    %c0_i32_0 = arith.constant 0 : i32
    %c0_i32_1 = arith.constant 0 : i32
    return %c0_i32, %c0_i32_0 : i32, i32
  }
  func.func @transform_2(%arg0: i32, %arg1: i32) -> (i32, i32) {
    %c0_i32 = arith.constant 0 : i32
    %c0_i32_0 = arith.constant 0 : i32
    %c0_i32_1 = arith.constant 0 : i32
    return %c0_i32, %c0_i32_0 : i32, i32
  }
  func.func @transform_3(%arg0: i32, %arg1: i32) -> (i32, i32, i32) {
    %c0_i32 = arith.constant 0 : i32
    %c0_i32_0 = arith.constant 0 : i32
    return %arg0, %arg1, %c0_i32 : i32, i32, i32
  }
}

</mosaic_0001>

<llo_original>
// kernel: tile.9
$region0: #{tile.9}
  %s0 = inlined_call_operand.vmem [shape: f32[4,64], index: 0, kind: input, shape index: {}]
  %s1 = inlined_call_operand.vmem [shape: f32[1,256], index: 1, kind: output, shape index: {}]
  $region1: #{tile.9} parent=0
    #allocation0 [shape = 'u8[8192]{0}', space=vmem, size = 0x2000, scoped, tag = 'scoped mem for output reshape']
    #allocation1 [shape = 'u8[4096]{0}', space=vmem, size = 0x1000, scoped, tag = 'scoped mem for input reshape']
    %s3 = ssub.s32 16, 1
    %v4 = vld [vmem:[%s0] sm:%s3]
    %5 = vst [vmem:[#allocation1] sm:%s3] %v4
    %s6 = smov 3
    %v7 = vld [vmem:[#allocation1] ss:$2 sm:%s6]
    %vm8 = vcmask 523264
    %9 = vst.msk [vmem:[#allocation0] ss:$8 sm:$0x3] %vm8, %v7
    %s10 = scalar_lea.vmem [#allocation1], 1
    %s11 = smov 3
    %v12 = vld [vmem:[%s10] ss:$2 sm:%s11]
    %13 = vrot.lane.b32.xlu0 %v12, 64
    %v14 = vpop.permute.xlu0 %13
    %vm15 = vcmask 1048064
    %16 = vst.msk [vmem:[#allocation0] ss:$8 sm:$0x3] %vm15, %v14
    %s18 = ssub.s32 2, 1
    %v19 = vld [vmem:[#allocation0] sm:%s18]
    %s21 = ssub.s32 2, 1
    %22 = vst [vmem:[%s1] sm:%s21] %v19
    %s23 = scalar_lea.vmem [#allocation0], 8
    %v24 = vld [vmem:[%s23] sm:%s18]
    %s26 = ssub.s32 2, 1
    %s27 = scalar_lea.vmem %s1, 1
    %28 = vst [vmem:[%s27] sm:%s26] %v24

// kernel: tile.8
$region0: #{tile.8}
  #allocation0 [shape = 's32[1]{0}', space=sflag, size = 0x4, scoped, tag = 'scoped memory for tile.8']
  %s0 = inlined_call_operand.vmem [shape: f32[64], index: 0, kind: input, shape index: {}]
  %s1 = inlined_call_operand.vmem [shape: f32[4,64], index: 1, kind: output, shape index: {}]
  // Predicated region
  $region2: #{tile.8} parent=0 // pred_check
    _
  $region3: #{tile.8} parent=0 // pred_check_branch
    %3 = sbr.rel (0) target = $region5
  $region4: #{tile.8} parent=0 // pred_region
    _
  $region5: #{tile.8} parent=0 // pred_fallthru
    _
  %v4 = vld [vmem:[%s0] ss:$0 sm:$0xff]
  %5 = vst [vmem:[%s1] sm:$0xf] %v4

// kernel: upblock_forward.1
$region0: #{upblock_forward.1}
  #allocation0 [shape = 'u32[]', space=smem, size = 0x4, offset = 0x4, fixed_abs, tag = 'smem constant byte address 0x4 - core index']
  #allocation1 [shape = 'u32[72,128]{1,0:T(1,128)}', space=vmem, size = 0x9000, scoped, tag = 'internal scratch']
  %s0 = inlined_call_operand.vmem [shape: f32[2,304,32], index: 0, kind: input, shape index: {}]
  %s1 = inlined_call_operand.vmem [shape: f32[288,256], index: 1, kind: input, shape index: {}]
  %s2 = inlined_call_operand.vmem [shape: f32[1,256], index: 2, kind: input, shape index: {}]
  %s3 = inlined_call_operand.vmem [shape: f32[2,256,256], index: 3, kind: output, shape index: {}]
  %s4 = sld [smem:[#allocation0]]
  $region45: #{upblock_forward.1} parent=0
    _
  %s6 = ssub.s32 1, %s4
  %s7 = scalar_select 0, %s6, %s4
  loop: start=0, step=1, limit=6
  $region2: #{upblock_forward.1} parent=0 // loop_pre_header
    _
  $region3: #{upblock_forward.1} parent=0 // loop_header
    %s9 = sphi 0, %s13
    %p10 = scmp.ge.s32.totalorder %s9, 6
    %s16 = sphi 0, %s28
    %s17 = sphi 0, %s24
    %s18 = sphi 0, %s16
    %s19 = sphi 0, %s17
    %s20 = sphi 0, %s18
    %s21 = sphi 0, %s19
    %s31 = sphi 0, %s33
    %s34 = sphi 0, %s31
    %s35 = sphi 0, %s34
    %s51 = sphi 0, %s35
    %s55 = sphi 0, %s55
    %s57 = sphi 0, %s55
    %s58 = sphi 0, %s57
    %s72 = sphi 0, %s58
    %s76 = sphi 0, %s76
    %s78 = sphi 0, %s76
    %s79 = sphi 0, %s78
    %s93 = sphi 0, %s79
    %s101 = sphi 0, %s103
    %s104 = sphi 0, %s101
    %s105 = sphi 0, %s104
    %s121 = sphi 0, %s105
  $region4: #{upblock_forward.1} parent=0 // loop_header_branch
    %12 = sbr.rel (%p10) target = $region8
  $region5: #{upblock_forward.1} parent=0 // loop_body
    %s14 = ssub.s32 %s9, 1
    %s15 = ssub.s32 %s9, 2
    %s22 = sadd.s32 1, %s17
    %p23 = scmp.ge.s32.totalorder %s22, 2
    %s24 = scalar_select %p23, 0, %s22
    %s25 = sadd.s32 1, %s16
    %s26 = scalar_select %p23, %s25, %s16
    %p27 = scmp.ge.s32.totalorder %s26, 2
    %s28 = scalar_select %p27, 0, %s26
    %s29 = ssub.s32 %s16, %s28
    %p30 = scmp.eq.s32.totalorder %s29, 0
    %s32 = sadd.s32 %s31, 1
    %s33 = scalar_select %p30, %s31, %s32
    %p36 = pneg %p30
    %p37 = scmp.eq.s32.totalorder %s9, 3
    %p38 = por %p36, %p37
    %p39 = scmp.ne.s32.totalorder %s31, %s34
    %p40 = scmp.eq.s32.totalorder %s9, 0
    %p41 = por %p39, %p40
    %p42 = scmp.ne.s32.totalorder %s31, %s34
    %p43 = scmp.eq.s32.totalorder %s14, 3
    %p44 = por %p42, %p43
    %p45 = scmp.ne.s32.totalorder %s34, %s35
    %p46 = scmp.eq.s32.totalorder %s14, 0
    %p47 = por %p45, %p46
    %p48 = scmp.ne.s32.totalorder %s34, %s35
    %p49 = scmp.eq.s32.totalorder %s15, 3
    %p50 = por %p48, %p49
    %p52 = scmp.ne.s32.totalorder %s35, %s51
    %p53 = scmp.eq.s32.totalorder %s15, 0
    %p54 = por %p52, %p53
    %s56 = sadd.s32 %s55, 1
    %p59 = scmp.eq.s32.totalorder %s9, 3
    %p60 = scmp.ne.s32.totalorder %s55, %s57
    %p61 = scmp.eq.s32.totalorder %s9, 0
    %p62 = por %p60, %p61
    %p63 = scmp.ne.s32.totalorder %s55, %s57
    %p64 = scmp.eq.s32.totalorder %s14, 3
    %p65 = por %p63, %p64
    %p66 = scmp.ne.s32.totalorder %s57, %s58
    %p67 = scmp.eq.s32.totalorder %s14, 0
    %p68 = por %p66, %p67
    %p69 = scmp.ne.s32.totalorder %s57, %s58
    %p70 = scmp.eq.s32.totalorder %s15, 3
    %p71 = por %p69, %p70
    %p73 = scmp.ne.s32.totalorder %s58, %s72
    %p74 = scmp.eq.s32.totalorder %s15, 0
    %p75 = por %p73, %p74
    %s77 = sadd.s32 %s76, 1
    %p80 = scmp.eq.s32.totalorder %s9, 3
    %p81 = scmp.ne.s32.totalorder %s76, %s78
    %p82 = scmp.eq.s32.totalorder %s9, 0
    %p83 = por %p81, %p82
    %p84 = scmp.ne.s32.totalorder %s76, %s78
    %p85 = scmp.eq.s32.totalorder %s14, 3
    %p86 = por %p84, %p85
    %p87 = scmp.ne.s32.totalorder %s78, %s79
    %p88 = scmp.eq.s32.totalorder %s14, 0
    %p89 = por %p87, %p88
    %p90 = scmp.ne.s32.totalorder %s78, %s79
    %p91 = scmp.eq.s32.totalorder %s15, 3
    %p92 = por %p90, %p91
    %p94 = scmp.ne.s32.totalorder %s79, %s93
    %p95 = scmp.eq.s32.totalorder %s15, 0
    %p96 = por %p94, %p95
    %s97 = ssub.s32 %s16, %s28
    %s98 = ssub.s32 %s17, %s24
    %s99 = sor.u32 %s97, %s98
    %p100 = scmp.eq.s32.totalorder %s99, 0
    %s102 = sadd.s32 %s101, 1
    %s103 = scalar_select %p100, %s101, %s102
    %p106 = pneg %p100
    %p107 = scmp.eq.s32.totalorder %s9, 3
    %p108 = por %p106, %p107
    %p109 = scmp.ne.s32.totalorder %s101, %s104
    %p110 = scmp.eq.s32.totalorder %s9, 0
    %p111 = por %p109, %p110
    %p112 = scmp.ne.s32.totalorder %s101, %s104
    %p113 = scmp.eq.s32.totalorder %s14, 3
    %p114 = por %p112, %p113
    %p115 = scmp.ne.s32.totalorder %s104, %s105
    %p116 = scmp.eq.s32.totalorder %s14, 0
    %p117 = por %p115, %p116
    %p118 = scmp.ne.s32.totalorder %s104, %s105
    %p119 = scmp.eq.s32.totalorder %s15, 3
    %p120 = por %p118, %p119
    %p122 = scmp.ne.s32.totalorder %s105, %s121
    %p123 = scmp.eq.s32.totalorder %s15, 0
    %p124 = por %p122, %p123
    %p125 = scmp.le.s32.totalorder 1, %s9
    %p126 = scmp.lt.s32.totalorder %s9, 5
    %p127 = pnand %p125, %p126
    %p128 = pneg %p127
    // Predicated region
    $region9: #{upblock_forward.1} parent=5 // pred_check
      _
    $region10: #{upblock_forward.1} parent=5 // pred_check_branch
      %130 = sbr.rel (%p127) target = $region12
    $region11: #{upblock_forward.1} parent=5 // pred_region
      %s131 = ssub.s32 %s9, 1
      // Predicated region
      $region13: #{upblock_forward.1} parent=11 // pred_check
        %p132 = pneg %p68
      $region14: #{upblock_forward.1} parent=11 // pred_check_branch
        %134 = sbr.rel (%p132) target = $region16
      $region15: #{upblock_forward.1} parent=11 // pred_region
        _
      $region16: #{upblock_forward.1} parent=11 // pred_fallthru
        _
      // Predicated region
      $region17: #{upblock_forward.1} parent=11 // pred_check
        %p135 = pneg %p89
      $region18: #{upblock_forward.1} parent=11 // pred_check_branch
        %137 = sbr.rel (%p135) target = $region20
      $region19: #{upblock_forward.1} parent=11 // pred_region
        _
      $region20: #{upblock_forward.1} parent=11 // pred_fallthru
        _
    $region12: #{upblock_forward.1} parent=5 // pred_fallthru
      _
    %p138 = scmp.lt.s32.totalorder %s9, 4
    // Predicated region
    $region21: #{upblock_forward.1} parent=5 // pred_check
      %p139 = pneg %p138
    $region22: #{upblock_forward.1} parent=5 // pred_check_branch
      %141 = sbr.rel (%p139) target = $region24
    $region23: #{upblock_forward.1} parent=5 // pred_region
      // Predicated region
      $region25: #{upblock_forward.1} parent=23 // pred_check
        %p142 = pneg %p41
      $region26: #{upblock_forward.1} parent=23 // pred_check_branch
        %144 = sbr.rel (%p142) target = $region28
      $region27: #{upblock_forward.1} parent=23 // pred_region
        %p145 = scmp.lt.s32.totalorder %s16, 1
        %s146 = scalar_select %p145, %s16, 1
        %s147 = smul.addr %s146, 38
        %s148 = smul.addr %s147, 8
        %s149 = scalar_lea.vmem %s0, %s148
      $region28: #{upblock_forward.1} parent=23 // pred_fallthru
        _
    $region24: #{upblock_forward.1} parent=5 // pred_fallthru
      _
    %p150 = scmp.le.s32.totalorder 1, %s9
    %p151 = scmp.lt.s32.totalorder %s9, 5
    %p152 = pnand %p150, %p151
    %p153 = pneg %p152
    // Predicated region
    $region29: #{upblock_forward.1} parent=5 // pred_check
      _
    $region30: #{upblock_forward.1} parent=5 // pred_check_branch
      %155 = sbr.rel (%p152) target = $region32
    $region31: #{upblock_forward.1} parent=5 // pred_region
      %s156 = ssub.s32 %s9, 1
      %p157 = scmp.lt.s32.totalorder %s18, 1
      %s158 = scalar_select %p157, %s18, 1
      %s159 = smul.addr %s158, 38
      %s160 = smul.addr %s159, 8
      %s161 = scalar_lea.vmem %s0, %s160
      %p162 = pneg %p47
      %p163 = pneg %p44
      %p164 = pneg %p68
      %p165 = pneg %p65
      %p166 = pneg %p89
      %p167 = pneg %p86
      %p168 = pneg %p117
      %p169 = pneg %p114
      %s170 = smul.u32 16, %s19
      %p171 = scmp.lt.s32.totalorder %s18, 1
      %s172 = scalar_select %p171, %s18, 1
      %p173 = scmp.lt.s32.totalorder %s170, 31
      %s174 = scalar_select %p173, %s170, 31
      %s175 = smul.addr %s174, 2
      %s176 = smul.addr %s172, 64
      %s177 = sadd.s32 %s175, %s176
      %s178 = smul.addr %s177, 8
      %s179 = scalar_lea.vmem %s3, %s178
      %p180 = scmp.lt.s32.totalorder %s18, 1
      %s181 = scalar_select %p180, %s18, 1
      %s182 = smul.addr %s181, 38
      %s183 = smul.addr %s182, 8
      %s184 = scalar_lea.vmem %s0, %s183
      %s185 = smul.u32 16, %s19
      %p186 = scmp.lt.s32.totalorder %s18, 1
      %s187 = scalar_select %p186, %s18, 1
      %p188 = scmp.lt.s32.totalorder %s185, 31
      %s189 = scalar_select %p188, %s185, 31
      %s190 = smul.addr %s189, 2
      %s191 = smul.addr %s187, 64
      %s192 = sadd.s32 %s190, %s191
      %s193 = smul.addr %s192, 8
      %s194 = scalar_lea.vmem %s3, %s193
      %s195 = smul.u32 16, %s19
      %s196 = smul.u32 %s19, 128
      %v197 = vlaneseq
      %v198 = vshrl.u32 %v197, 7
      %v199 = vadd.s32 %v198, 8
      %v200 = vadd.s32 %v198, 16
      %v201 = vadd.s32 %v198, 24
      %v202 = vadd.s32 %v198, 32
      %v203 = vadd.s32 %v198, 40
      %v204 = vadd.s32 %v198, 48
      %v205 = vadd.s32 %v198, 56
      %v206 = vadd.s32 %v198, 64
      %v207 = vadd.s32 %v198, 72
      %v208 = vadd.s32 %v198, 80
      %v209 = vadd.s32 %v198, 88
      %v210 = vadd.s32 %v198, 96
      %v211 = vadd.s32 %v198, 104
      %v212 = vadd.s32 %v198, 112
      %v213 = vadd.s32 %v198, 120
      %v214 = vand.u32 %v198, 15
      %v215 = vand.u32 %v199, 15
      %v216 = vand.u32 %v200, 15
      %v217 = vand.u32 %v201, 15
      %v218 = vand.u32 %v202, 15
      %v219 = vand.u32 %v203, 15
      %v220 = vand.u32 %v204, 15
      %v221 = vand.u32 %v205, 15
      %v222 = vand.u32 %v206, 15
      %v223 = vand.u32 %v207, 15
      %v224 = vand.u32 %v208, 15
      %v225 = vand.u32 %v209, 15
      %v226 = vand.u32 %v210, 15
      %v227 = vand.u32 %v211, 15
      %v228 = vand.u32 %v212, 15
      %v229 = vand.u32 %v213, 15
      %vm230 = vcmp.eq.s32.totalorder %v214, 0
      %vm231 = vcmp.eq.s32.totalorder %v215, 0
      %vm232 = vcmp.eq.s32.totalorder %v216, 0
      %vm233 = vcmp.eq.s32.totalorder %v217, 0
      %vm234 = vcmp.eq.s32.totalorder %v218, 0
      %vm235 = vcmp.eq.s32.totalorder %v219, 0
      %vm236 = vcmp.eq.s32.totalorder %v220, 0
      %vm237 = vcmp.eq.s32.totalorder %v221, 0
      %vm238 = vcmp.eq.s32.totalorder %v222, 0
      %vm239 = vcmp.eq.s32.totalorder %v223, 0
      %vm240 = vcmp.eq.s32.totalorder %v224, 0
      %vm241 = vcmp.eq.s32.totalorder %v225, 0
      %vm242 = vcmp.eq.s32.totalorder %v226, 0
      %vm243 = vcmp.eq.s32.totalorder %v227, 0
      %vm244 = vcmp.eq.s32.totalorder %v228, 0
      %vm245 = vcmp.eq.s32.totalorder %v229, 0
      %v246 = vsel %vm230, 0.0, 1.0
      %v247 = vsel %vm231, 0.0, 1.0
      %v248 = vsel %vm232, 0.0, 1.0
      %v249 = vsel %vm233, 0.0, 1.0
      %v250 = vsel %vm234, 0.0, 1.0
      %v251 = vsel %vm235, 0.0, 1.0
      %v252 = vsel %vm236, 0.0, 1.0
      %v253 = vsel %vm237, 0.0, 1.0
      %v254 = vsel %vm238, 0.0, 1.0
      %v255 = vsel %vm239, 0.0, 1.0
      %v256 = vsel %vm240, 0.0, 1.0
      %v257 = vsel %vm241, 0.0, 1.0
      %v258 = vsel %vm242, 0.0, 1.0
      %v259 = vsel %vm243, 0.0, 1.0
      %v260 = vsel %vm244, 0.0, 1.0
      %v261 = vsel %vm245, 0.0, 1.0
      %vm262 = vcmp.eq.s32.totalorder %v214, 15
      %vm263 = vcmp.eq.s32.totalorder %v215, 15
      %vm264 = vcmp.eq.s32.totalorder %v216, 15
      %vm265 = vcmp.eq.s32.totalorder %v217, 15
      %vm266 = vcmp.eq.s32.totalorder %v218, 15
      %vm267 = vcmp.eq.s32.totalorder %v219, 15
      %vm268 = vcmp.eq.s32.totalorder %v220, 15
      %vm269 = vcmp.eq.s32.totalorder %v221, 15
      %vm270 = vcmp.eq.s32.totalorder %v222, 15
      %vm271 = vcmp.eq.s32.totalorder %v223, 15
      %vm272 = vcmp.eq.s32.totalorder %v224, 15
      %vm273 = vcmp.eq.s32.totalorder %v225, 15
      %vm274 = vcmp.eq.s32.totalorder %v226, 15
      %vm275 = vcmp.eq.s32.totalorder %v227, 15
      %vm276 = vcmp.eq.s32.totalorder %v228, 15
      %vm277 = vcmp.eq.s32.totalorder %v229, 15
      %v278 = vsel %vm262, 0.0, 1.0
      %v279 = vsel %vm263, 0.0, 1.0
      %v280 = vsel %vm264, 0.0, 1.0
      %v281 = vsel %vm265, 0.0, 1.0
      %v282 = vsel %vm266, 0.0, 1.0
      %v283 = vsel %vm267, 0.0, 1.0
      %v284 = vsel %vm268, 0.0, 1.0
      %v285 = vsel %vm269, 0.0, 1.0
      %v286 = vsel %vm270, 0.0, 1.0
      %v287 = vsel %vm271, 0.0, 1.0
      %v288 = vsel %vm272, 0.0, 1.0
      %v289 = vsel %vm273, 0.0, 1.0
      %v290 = vsel %vm274, 0.0, 1.0
      %v291 = vsel %vm275, 0.0, 1.0
      %v292 = vsel %vm276, 0.0, 1.0
      %v293 = vsel %vm277, 0.0, 1.0
      %s294 = sadd.s32 %s196, 7
      %s295 = scalar_lea.vmem %s184, %s294
      %v296 = vld [vmem:[%s295] sm:$0xff]
      %v297 = vld [vmem:[%s295 + $0x8] sm:$0xff]
      %v298 = vld [vmem:[%s295 + $0x10] sm:$0xff]
      %v299 = vld [vmem:[%s295 + $0x18] sm:$0xff]
      %v300 = vld [vmem:[%s295 + $0x20] sm:$0xff]
      %v301 = vld [vmem:[%s295 + $0x28] sm:$0xff]
      %v302 = vld [vmem:[%s295 + $0x30] sm:$0xff]
      %v303 = vld [vmem:[%s295 + $0x38] sm:$0xff]
      %v304 = vld [vmem:[%s295 + $0x40] sm:$0xff]
      %v305 = vld [vmem:[%s295 + $0x48] sm:$0xff]
      %v306 = vld [vmem:[%s295 + $0x50] sm:$0xff]
      %v307 = vld [vmem:[%s295 + $0x58] sm:$0xff]
      %v308 = vld [vmem:[%s295 + $0x60] sm:$0xff]
      %v309 = vld [vmem:[%s295 + $0x68] sm:$0xff]
      %v310 = vld [vmem:[%s295 + $0x70] sm:$0xff]
      %v311 = vld [vmem:[%s295 + $0x78] sm:$0xff]
      %v312 = vmul.f32 %v296, %v246
      %v313 = vmul.f32 %v297, %v247
      %v314 = vmul.f32 %v298, %v248
      %v315 = vmul.f32 %v299, %v249
      %v316 = vmul.f32 %v300, %v250
      %v317 = vmul.f32 %v301, %v251
      %v318 = vmul.f32 %v302, %v252
      %v319 = vmul.f32 %v303, %v253
      %v320 = vmul.f32 %v304, %v254
      %v321 = vmul.f32 %v305, %v255
      %v322 = vmul.f32 %v306, %v256
      %v323 = vmul.f32 %v307, %v257
      %v324 = vmul.f32 %v308, %v258
      %v325 = vmul.f32 %v309, %v259
      %v326 = vmul.f32 %v310, %v260
      %v327 = vmul.f32 %v311, %v261
      %v328 = vld [vmem:[%s1] sm:$0xff]
      %v329 = vld [vmem:[%s1 + $0x8] sm:$0xff]
      %v330 = vld [vmem:[%s1 + $0x10] sm:$0xff]
      %v331 = vld [vmem:[%s1 + $0x18] sm:$0xff]
      %v332 = vld [vmem:[%s1 + $0x20] sm:$0xff]
      %v333 = vld [vmem:[%s1 + $0x28] sm:$0xff]
      %v334 = vld [vmem:[%s1 + $0x30] sm:$0xff]
      %v335 = vld [vmem:[%s1 + $0x38] sm:$0xff]
      %s336 = sadd.s32 %s196, 8
      %s337 = scalar_lea.vmem %s184, %s336
      %v338 = vld [vmem:[%s337] sm:$0xff]
      %v339 = vld [vmem:[%s337 + $0x8] sm:$0xff]
      %v340 = vld [vmem:[%s337 + $0x10] sm:$0xff]
      %v341 = vld [vmem:[%s337 + $0x18] sm:$0xff]
      %v342 = vld [vmem:[%s337 + $0x20] sm:$0xff]
      %v343 = vld [vmem:[%s337 + $0x28] sm:$0xff]
      %v344 = vld [vmem:[%s337 + $0x30] sm:$0xff]
      %v345 = vld [vmem:[%s337 + $0x38] sm:$0xff]
      %v346 = vld [vmem:[%s337 + $0x40] sm:$0xff]
      %v347 = vld [vmem:[%s337 + $0x48] sm:$0xff]
      %v348 = vld [vmem:[%s337 + $0x50] sm:$0xff]
      %v349 = vld [vmem:[%s337 + $0x58] sm:$0xff]
      %v350 = vld [vmem:[%s337 + $0x60] sm:$0xff]
      %v351 = vld [vmem:[%s337 + $0x68] sm:$0xff]
      %v352 = vld [vmem:[%s337 + $0x70] sm:$0xff]
      %v353 = vld [vmem:[%s337 + $0x78] sm:$0xff]
      %v354 = vld [vmem:[%s1 + $0x40] sm:$0xff]
      %v355 = vld [vmem:[%s1 + $0x48] sm:$0xff]
      %v356 = vld [vmem:[%s1 + $0x50] sm:$0xff]
      %v357 = vld [vmem:[%s1 + $0x58] sm:$0xff]
      %v358 = vld [vmem:[%s1 + $0x60] sm:$0xff]
      %v359 = vld [vmem:[%s1 + $0x68] sm:$0xff]
      %v360 = vld [vmem:[%s1 + $0x70] sm:$0xff]
      %v361 = vld [vmem:[%s1 + $0x78] sm:$0xff]
      %vm362 = vcmask 261120
      %v364 = vsel %vm362, %v338, 0
      %v367 = vsel %vm362, %v339, 0
      %v370 = vsel %vm362, %v340, 0
      %v373 = vsel %vm362, %v341, 0
      %v376 = vsel %vm362, %v342, 0
      %v379 = vsel %vm362, %v343, 0
      %v382 = vsel %vm362, %v344, 0
      %v385 = vsel %vm362, %v345, 0
      %v388 = vsel %vm362, %v346, 0
      %v391 = vsel %vm362, %v347, 0
      %v394 = vsel %vm362, %v348, 0
      %v397 = vsel %vm362, %v349, 0
      %v400 = vsel %vm362, %v350, 0
      %v403 = vsel %vm362, %v351, 0
      %v406 = vsel %vm362, %v352, 0
      %v409 = vsel %vm362, %v353, 0
      %411 = vmatpush.msra.mxu0 0.0
      %412 = vmatpush.msra.mxu0 0.0
      %413 = vmatpush.msra.mxu0 0.0
      %414 = vmatpush.msra.mxu0 0.0
      %415 = vmatpush.msra.mxu0 0.0
      %416 = vmatpush.msra.mxu0 0.0
      %417 = vmatpush.msra.mxu0 0.0
      %418 = vmatpush.msra.mxu0 0.0
      %419 = vmatpush.msra.mxu0 0.0
      %420 = vmatpush.msra.mxu0 0.0
      %421 = vmatpush.msra.mxu0 0.0
      %422 = vmatpush.msra.mxu0 0.0
      %423 = vmatpush.msra.mxu0 %v360
      %424 = vmatpush.msra.mxu0 %v358
      %425 = vmatpush.msra.mxu0 %v356
      %426 = vmatpush.msra.mxu0 %v354
      %427 = vmatmul.f32.gmra.mxu0 %v364
      %v428 = vpop.f32.mrf.mxu0
      %v429 = vadd.f32 0.0, %v428
      %430 = vmatmul.f32.gmra.mxu0 %v367
      %v431 = vpop.f32.mrf.mxu0
      %v432 = vadd.f32 0.0, %v431
      %433 = vmatmul.f32.gmra.mxu0 %v370
      %v434 = vpop.f32.mrf.mxu0
      %v435 = vadd.f32 0.0, %v434
      %436 = vmatmul.f32.gmra.mxu0 %v373
      %v437 = vpop.f32.mrf.mxu0
      %v438 = vadd.f32 0.0, %v437
      %439 = vmatmul.f32.gmra.mxu0 %v376
      %v440 = vpop.f32.mrf.mxu0
      %v441 = vadd.f32 0.0, %v440
      %442 = vmatmul.f32.gmra.mxu0 %v379
      %v443 = vpop.f32.mrf.mxu0
      %v444 = vadd.f32 0.0, %v443
      %445 = vmatmul.f32.gmra.mxu0 %v382
      %v446 = vpop.f32.mrf.mxu0
      %v447 = vadd.f32 0.0, %v446
      %448 = vmatmul.f32.gmra.mxu0 %v385
      %v449 = vpop.f32.mrf.mxu0
      %v450 = vadd.f32 0.0, %v449
      %451 = vmatmul.f32.gmra.mxu0 %v388
      %v452 = vpop.f32.mrf.mxu0
      %v453 = vadd.f32 0.0, %v452
      %454 = vmatmul.f32.gmra.mxu0 %v391
      %v455 = vpop.f32.mrf.mxu0
      %v456 = vadd.f32 0.0, %v455
      %457 = vmatmul.f32.gmra.mxu0 %v394
      %v458 = vpop.f32.mrf.mxu0
      %v459 = vadd.f32 0.0, %v458
      %460 = vmatmul.f32.gmra.mxu0 %v397
      %v461 = vpop.f32.mrf.mxu0
      %v462 = vadd.f32 0.0, %v461
      %463 = vmatmul.f32.gmra.mxu0 %v400
      %v464 = vpop.f32.mrf.mxu0
      %v465 = vadd.f32 0.0, %v464
      %466 = vmatmul.f32.gmra.mxu0 %v403
      %v467 = vpop.f32.mrf.mxu0
      %v468 = vadd.f32 0.0, %v467
      %469 = vmatmul.f32.gmra.mxu0 %v406
      %v470 = vpop.f32.mrf.mxu0
      %v471 = vadd.f32 0.0, %v470
      %472 = vmatmul.f32.gmra.mxu0 %v409
      %v473 = vpop.f32.mrf.mxu0
      %v474 = vadd.f32 0.0, %v473
      %475 = vdwg.mxu0
      %476 = vmatpush.msra.mxu0 0.0
      %477 = vmatpush.msra.mxu0 0.0
      %478 = vmatpush.msra.mxu0 0.0
      %479 = vmatpush.msra.mxu0 0.0
      %480 = vmatpush.msra.mxu0 0.0
      %481 = vmatpush.msra.mxu0 0.0
      %482 = vmatpush.msra.mxu0 0.0
      %483 = vmatpush.msra.mxu0 0.0
      %484 = vmatpush.msra.mxu0 0.0
      %485 = vmatpush.msra.mxu0 0.0
      %486 = vmatpush.msra.mxu0 0.0
      %487 = vmatpush.msra.mxu0 0.0
      %488 = vmatpush.msra.mxu0 %v361
      %489 = vmatpush.msra.mxu0 %v359
      %490 = vmatpush.msra.mxu0 %v357
      %491 = vmatpush.msra.mxu0 %v355
      %492 = vmatmul.f32.gmra.mxu0 %v364
      %v493 = vpop.f32.mrf.mxu0
      %v494 = vadd.f32 0.0, %v493
      %495 = vmatmul.f32.gmra.mxu0 %v367
      %v496 = vpop.f32.mrf.mxu0
      %v497 = vadd.f32 0.0, %v496
      %498 = vmatmul.f32.gmra.mxu0 %v370
      %v499 = vpop.f32.mrf.mxu0
      %v500 = vadd.f32 0.0, %v499
      %501 = vmatmul.f32.gmra.mxu0 %v373
      %v502 = vpop.f32.mrf.mxu0
      %v503 = vadd.f32 0.0, %v502
      %504 = vmatmul.f32.gmra.mxu0 %v376
      %v505 = vpop.f32.mrf.mxu0
      %v506 = vadd.f32 0.0, %v505
      %507 = vmatmul.f32.gmra.mxu0 %v379
      %v508 = vpop.f32.mrf.mxu0
      %v509 = vadd.f32 0.0, %v508
      %510 = vmatmul.f32.gmra.mxu0 %v382
      %v511 = vpop.f32.mrf.mxu0
      %v512 = vadd.f32 0.0, %v511
      %513 = vmatmul.f32.gmra.mxu0 %v385
      %v514 = vpop.f32.mrf.mxu0
      %v515 = vadd.f32 0.0, %v514
      %516 = vmatmul.f32.gmra.mxu0 %v388
      %v517 = vpop.f32.mrf.mxu0
      %v518 = vadd.f32 0.0, %v517
      %519 = vmatmul.f32.gmra.mxu0 %v391
      %v520 = vpop.f32.mrf.mxu0
      %v521 = vadd.f32 0.0, %v520
      %522 = vmatmul.f32.gmra.mxu0 %v394
      %v523 = vpop.f32.mrf.mxu0
      %v524 = vadd.f32 0.0, %v523
      %525 = vmatmul.f32.gmra.mxu0 %v397
      %v526 = vpop.f32.mrf.mxu0
      %v527 = vadd.f32 0.0, %v526
      %528 = vmatmul.f32.gmra.mxu0 %v400
      %v529 = vpop.f32.mrf.mxu0
      %v530 = vadd.f32 0.0, %v529
      %531 = vmatmul.f32.gmra.mxu0 %v403
      %v532 = vpop.f32.mrf.mxu0
      %v533 = vadd.f32 0.0, %v532
      %534 = vmatmul.f32.gmra.mxu0 %v406
      %v535 = vpop.f32.mrf.mxu0
      %v536 = vadd.f32 0.0, %v535
      %537 = vmatmul.f32.gmra.mxu0 %v409
      %v538 = vpop.f32.mrf.mxu0
      %v539 = vadd.f32 0.0, %v538
      %540 = vdwg.mxu0
      %v542 = vsel %vm362, %v312, 0
      %v545 = vsel %vm362, %v313, 0
      %v548 = vsel %vm362, %v314, 0
      %v551 = vsel %vm362, %v315, 0
      %v554 = vsel %vm362, %v316, 0
      %v557 = vsel %vm362, %v317, 0
      %v560 = vsel %vm362, %v318, 0
      %v563 = vsel %vm362, %v319, 0
      %v566 = vsel %vm362, %v320, 0
      %v569 = vsel %vm362, %v321, 0
      %v572 = vsel %vm362, %v322, 0
      %v575 = vsel %vm362, %v323, 0
      %v578 = vsel %vm362, %v324, 0
      %v581 = vsel %vm362, %v325, 0
      %v584 = vsel %vm362, %v326, 0
      %v587 = vsel %vm362, %v327, 0
      %589 = vmatpush.msra.mxu0 0.0
      %590 = vmatpush.msra.mxu0 0.0
      %591 = vmatpush.msra.mxu0 0.0
      %592 = vmatpush.msra.mxu0 0.0
      %593 = vmatpush.msra.mxu0 0.0
      %594 = vmatpush.msra.mxu0 0.0
      %595 = vmatpush.msra.mxu0 0.0
      %596 = vmatpush.msra.mxu0 0.0
      %597 = vmatpush.msra.mxu0 0.0
      %598 = vmatpush.msra.mxu0 0.0
      %599 = vmatpush.msra.mxu0 0.0
      %600 = vmatpush.msra.mxu0 0.0
      %601 = vmatpush.msra.mxu0 %v334
      %602 = vmatpush.msra.mxu0 %v332
      %603 = vmatpush.msra.mxu0 %v330
      %604 = vmatpush.msra.mxu0 %v328
      %605 = vmatmul.f32.gmra.mxu0 %v542
      %v606 = vpop.f32.mrf.mxu0
      %v607 = vadd.f32 %v429, %v606
      %608 = vmatmul.f32.gmra.mxu0 %v545
      %v609 = vpop.f32.mrf.mxu0
      %v610 = vadd.f32 %v432, %v609
      %611 = vmatmul.f32.gmra.mxu0 %v548
      %v612 = vpop.f32.mrf.mxu0
      %v613 = vadd.f32 %v435, %v612
      %614 = vmatmul.f32.gmra.mxu0 %v551
      %v615 = vpop.f32.mrf.mxu0
      %v616 = vadd.f32 %v438, %v615
      %617 = vmatmul.f32.gmra.mxu0 %v554
      %v618 = vpop.f32.mrf.mxu0
      %v619 = vadd.f32 %v441, %v618
      %620 = vmatmul.f32.gmra.mxu0 %v557
      %v621 = vpop.f32.mrf.mxu0
      %v622 = vadd.f32 %v444, %v621
      %623 = vmatmul.f32.gmra.mxu0 %v560
      %v624 = vpop.f32.mrf.mxu0
      %v625 = vadd.f32 %v447, %v624
      %626 = vmatmul.f32.gmra.mxu0 %v563
      %v627 = vpop.f32.mrf.mxu0
      %v628 = vadd.f32 %v450, %v627
      %629 = vmatmul.f32.gmra.mxu0 %v566
      %v630 = vpop.f32.mrf.mxu0
      %v631 = vadd.f32 %v453, %v630
      %632 = vmatmul.f32.gmra.mxu0 %v569
      %v633 = vpop.f32.mrf.mxu0
      %v634 = vadd.f32 %v456, %v633
      %635 = vmatmul.f32.gmra.mxu0 %v572
      %v636 = vpop.f32.mrf.mxu0
      %v637 = vadd.f32 %v459, %v636
      %638 = vmatmul.f32.gmra.mxu0 %v575
      %v639 = vpop.f32.mrf.mxu0
      %v640 = vadd.f32 %v462, %v639
      %641 = vmatmul.f32.gmra.mxu0 %v578
      %v642 = vpop.f32.mrf.mxu0
      %v643 = vadd.f32 %v465, %v642
      %644 = vmatmul.f32.gmra.mxu0 %v581
      %v645 = vpop.f32.mrf.mxu0
      %v646 = vadd.f32 %v468, %v645
      %647 = vmatmul.f32.gmra.mxu0 %v584
      %v648 = vpop.f32.mrf.mxu0
      %v649 = vadd.f32 %v471, %v648
      %650 = vmatmul.f32.gmra.mxu0 %v587
      %v651 = vpop.f32.mrf.mxu0
      %v652 = vadd.f32 %v474, %v651
      %653 = vdwg.mxu0
      %654 = vmatpush.msra.mxu0 0.0
      %655 = vmatpush.msra.mxu0 0.0
      %656 = vmatpush.msra.mxu0 0.0
      %657 = vmatpush.msra.mxu0 0.0
      %658 = vmatpush.msra.mxu0 0.0
      %659 = vmatpush.msra.mxu0 0.0
      %660 = vmatpush.msra.mxu0 0.0
      %661 = vmatpush.msra.mxu0 0.0
      %662 = vmatpush.msra.mxu0 0.0
      %663 = vmatpush.msra.mxu0 0.0
      %664 = vmatpush.msra.mxu0 0.0
      %665 = vmatpush.msra.mxu0 0.0
      %666 = vmatpush.msra.mxu0 %v335
      %667 = vmatpush.msra.mxu0 %v333
      %668 = vmatpush.msra.mxu0 %v331
      %669 = vmatpush.msra.mxu0 %v329
      %670 = vmatmul.f32.gmra.mxu0 %v542
      %v671 = vpop.f32.mrf.mxu0
      %v672 = vadd.f32 %v494, %v671
      %673 = vmatmul.f32.gmra.mxu0 %v545
      %v674 = vpop.f32.mrf.mxu0
      %v675 = vadd.f32 %v497, %v674
      %676 = vmatmul.f32.gmra.mxu0 %v548
      %v677 = vpop.f32.mrf.mxu0
      %v678 = vadd.f32 %v500, %v677
      %679 = vmatmul.f32.gmra.mxu0 %v551
      %v680 = vpop.f32.mrf.mxu0
      %v681 = vadd.f32 %v503, %v680
      %682 = vmatmul.f32.gmra.mxu0 %v554
      %v683 = vpop.f32.mrf.mxu0
      %v684 = vadd.f32 %v506, %v683
      %685 = vmatmul.f32.gmra.mxu0 %v557
      %v686 = vpop.f32.mrf.mxu0
      %v687 = vadd.f32 %v509, %v686
      %688 = vmatmul.f32.gmra.mxu0 %v560
      %v689 = vpop.f32.mrf.mxu0
      %v690 = vadd.f32 %v512, %v689
      %691 = vmatmul.f32.gmra.mxu0 %v563
      %v692 = vpop.f32.mrf.mxu0
      %v693 = vadd.f32 %v515, %v692
      %694 = vmatmul.f32.gmra.mxu0 %v566
      %v695 = vpop.f32.mrf.mxu0
      %v696 = vadd.f32 %v518, %v695
      %697 = vmatmul.f32.gmra.mxu0 %v569
      %v698 = vpop.f32.mrf.mxu0
      %v699 = vadd.f32 %v521, %v698
      %700 = vmatmul.f32.gmra.mxu0 %v572
      %v701 = vpop.f32.mrf.mxu0
      %v702 = vadd.f32 %v524, %v701
      %703 = vmatmul.f32.gmra.mxu0 %v575
      %v704 = vpop.f32.mrf.mxu0
      %v705 = vadd.f32 %v527, %v704
      %706 = vmatmul.f32.gmra.mxu0 %v578
      %v707 = vpop.f32.mrf.mxu0
      %v708 = vadd.f32 %v530, %v707
      %709 = vmatmul.f32.gmra.mxu0 %v581
      %v710 = vpop.f32.mrf.mxu0
      %v711 = vadd.f32 %v533, %v710
      %712 = vmatmul.f32.gmra.mxu0 %v584
      %v713 = vpop.f32.mrf.mxu0
      %v714 = vadd.f32 %v536, %v713
      %715 = vmatmul.f32.gmra.mxu0 %v587
      %v716 = vpop.f32.mrf.mxu0
      %v717 = vadd.f32 %v539, %v716
      %718 = vdwg.mxu0
      %s719 = sadd.s32 %s196, 9
      %s720 = scalar_lea.vmem %s184, %s719
      %v721 = vld [vmem:[%s720] sm:$0xff]
      %v722 = vld [vmem:[%s720 + $0x8] sm:$0xff]
      %v723 = vld [vmem:[%s720 + $0x10] sm:$0xff]
      %v724 = vld [vmem:[%s720 + $0x18] sm:$0xff]
      %v725 = vld [vmem:[%s720 + $0x20] sm:$0xff]
      %v726 = vld [vmem:[%s720 + $0x28] sm:$0xff]
      %v727 = vld [vmem:[%s720 + $0x30] sm:$0xff]
      %v728 = vld [vmem:[%s720 + $0x38] sm:$0xff]
      %v729 = vld [vmem:[%s720 + $0x40] sm:$0xff]
      %v730 = vld [vmem:[%s720 + $0x48] sm:$0xff]
      %v731 = vld [vmem:[%s720 + $0x50] sm:$0xff]
      %v732 = vld [vmem:[%s720 + $0x58] sm:$0xff]
      %v733 = vld [vmem:[%s720 + $0x60] sm:$0xff]
      %v734 = vld [vmem:[%s720 + $0x68] sm:$0xff]
      %v735 = vld [vmem:[%s720 + $0x70] sm:$0xff]
      %v736 = vld [vmem:[%s720 + $0x78] sm:$0xff]
      %v737 = vmul.f32 %v721, %v278
      %v738 = vmul.f32 %v722, %v279
      %v739 = vmul.f32 %v723, %v280
      %v740 = vmul.f32 %v724, %v281
      %v741 = vmul.f32 %v725, %v282
      %v742 = vmul.f32 %v726, %v283
      %v743 = vmul.f32 %v727, %v284
      %v744 = vmul.f32 %v728, %v285
      %v745 = vmul.f32 %v729, %v286
      %v746 = vmul.f32 %v730, %v287
      %v747 = vmul.f32 %v731, %v288
      %v748 = vmul.f32 %v732, %v289
      %v749 = vmul.f32 %v733, %v290
      %v750 = vmul.f32 %v734, %v291
      %v751 = vmul.f32 %v735, %v292
      %v752 = vmul.f32 %v736, %v293
      %v753 = vld [vmem:[%s1 + $0x80] sm:$0xff]
      %v754 = vld [vmem:[%s1 + $0x88] sm:$0xff]
      %v755 = vld [vmem:[%s1 + $0x90] sm:$0xff]
      %v756 = vld [vmem:[%s1 + $0x98] sm:$0xff]
      %v757 = vld [vmem:[%s1 + $0xa0] sm:$0xff]
      %v758 = vld [vmem:[%s1 + $0xa8] sm:$0xff]
      %v759 = vld [vmem:[%s1 + $0xb0] sm:$0xff]
      %v760 = vld [vmem:[%s1 + $0xb8] sm:$0xff]
      %v762 = vsel %vm362, %v737, 0
      %v765 = vsel %vm362, %v738, 0
      %v768 = vsel %vm362, %v739, 0
      %v771 = vsel %vm362, %v740, 0
      %v774 = vsel %vm362, %v741, 0
      %v777 = vsel %vm362, %v742, 0
      %v780 = vsel %vm362, %v743, 0
      %v783 = vsel %vm362, %v744, 0
      %v786 = vsel %vm362, %v745, 0
      %v789 = vsel %vm362, %v746, 0
      %v792 = vsel %vm362, %v747, 0
      %v795 = vsel %vm362, %v748, 0
      %v798 = vsel %vm362, %v749, 0
      %v801 = vsel %vm362, %v750, 0
      %v804 = vsel %vm362, %v751, 0
      %v807 = vsel %vm362, %v752, 0
      %809 = vmatpush.msra.mxu0 0.0
      %810 = vmatpush.msra.mxu0 0.0
      %811 = vmatpush.msra.mxu0 0.0
      %812 = vmatpush.msra.mxu0 0.0
      %813 = vmatpush.msra.mxu0 0.0
      %814 = vmatpush.msra.mxu0 0.0
      %815 = vmatpush.msra.mxu0 0.0
      %816 = vmatpush.msra.mxu0 0.0
      %817 = vmatpush.msra.mxu0 0.0
      %818 = vmatpush.msra.mxu0 0.0
      %819 = vmatpush.msra.mxu0 0.0
      %820 = vmatpush.msra.mxu0 0.0
      %821 = vmatpush.msra.mxu0 %v759
      %822 = vmatpush.msra.mxu0 %v757
      %823 = vmatpush.msra.mxu0 %v755
      %824 = vmatpush.msra.mxu0 %v753
      %825 = vmatmul.f32.gmra.mxu0 %v762
      %v826 = vpop.f32.mrf.mxu0
      %v827 = vadd.f32 0.0, %v826
      %828 = vmatmul.f32.gmra.mxu0 %v765
      %v829 = vpop.f32.mrf.mxu0
      %v830 = vadd.f32 0.0, %v829
      %831 = vmatmul.f32.gmra.mxu0 %v768
      %v832 = vpop.f32.mrf.mxu0
      %v833 = vadd.f32 0.0, %v832
      %834 = vmatmul.f32.gmra.mxu0 %v771
      %v835 = vpop.f32.mrf.mxu0
      %v836 = vadd.f32 0.0, %v835
      %837 = vmatmul.f32.gmra.mxu0 %v774
      %v838 = vpop.f32.mrf.mxu0
      %v839 = vadd.f32 0.0, %v838
      %840 = vmatmul.f32.gmra.mxu0 %v777
      %v841 = vpop.f32.mrf.mxu0
      %v842 = vadd.f32 0.0, %v841
      %843 = vmatmul.f32.gmra.mxu0 %v780
      %v844 = vpop.f32.mrf.mxu0
      %v845 = vadd.f32 0.0, %v844
      %846 = vmatmul.f32.gmra.mxu0 %v783
      %v847 = vpop.f32.mrf.mxu0
      %v848 = vadd.f32 0.0, %v847
      %849 = vmatmul.f32.gmra.mxu0 %v786
      %v850 = vpop.f32.mrf.mxu0
      %v851 = vadd.f32 0.0, %v850
      %852 = vmatmul.f32.gmra.mxu0 %v789
      %v853 = vpop.f32.mrf.mxu0
      %v854 = vadd.f32 0.0, %v853
      %855 = vmatmul.f32.gmra.mxu0 %v792
      %v856 = vpop.f32.mrf.mxu0
      %v857 = vadd.f32 0.0, %v856
      %858 = vmatmul.f32.gmra.mxu0 %v795
      %v859 = vpop.f32.mrf.mxu0
      %v860 = vadd.f32 0.0, %v859
      %861 = vmatmul.f32.gmra.mxu0 %v798
      %v862 = vpop.f32.mrf.mxu0
      %v863 = vadd.f32 0.0, %v862
      %864 = vmatmul.f32.gmra.mxu0 %v801
      %v865 = vpop.f32.mrf.mxu0
      %v866 = vadd.f32 0.0, %v865
      %867 = vmatmul.f32.gmra.mxu0 %v804
      %v868 = vpop.f32.mrf.mxu0
      %v869 = vadd.f32 0.0, %v868
      %870 = vmatmul.f32.gmra.mxu0 %v807
      %v871 = vpop.f32.mrf.mxu0
      %v872 = vadd.f32 0.0, %v871
      %873 = vdwg.mxu0
      %874 = vmatpush.msra.mxu0 0.0
      %875 = vmatpush.msra.mxu0 0.0
      %876 = vmatpush.msra.mxu0 0.0
      %877 = vmatpush.msra.mxu0 0.0
      %878 = vmatpush.msra.mxu0 0.0
      %879 = vmatpush.msra.mxu0 0.0
      %880 = vmatpush.msra.mxu0 0.0
      %881 = vmatpush.msra.mxu0 0.0
      %882 = vmatpush.msra.mxu0 0.0
      %883 = vmatpush.msra.mxu0 0.0
      %884 = vmatpush.msra.mxu0 0.0
      %885 = vmatpush.msra.mxu0 0.0
      %886 = vmatpush.msra.mxu0 %v760
      %887 = vmatpush.msra.mxu0 %v758
      %888 = vmatpush.msra.mxu0 %v756
      %889 = vmatpush.msra.mxu0 %v754
      %890 = vmatmul.f32.gmra.mxu0 %v762
      %v891 = vpop.f32.mrf.mxu0
      %v892 = vadd.f32 0.0, %v891
      %893 = vmatmul.f32.gmra.mxu0 %v765
      %v894 = vpop.f32.mrf.mxu0
      %v895 = vadd.f32 0.0, %v894
      %896 = vmatmul.f32.gmra.mxu0 %v768
      %v897 = vpop.f32.mrf.mxu0
      %v898 = vadd.f32 0.0, %v897
      %899 = vmatmul.f32.gmra.mxu0 %v771
      %v900 = vpop.f32.mrf.mxu0
      %v901 = vadd.f32 0.0, %v900
      %902 = vmatmul.f32.gmra.mxu0 %v774
      %v903 = vpop.f32.mrf.mxu0
      %v904 = vadd.f32 0.0, %v903
      %905 = vmatmul.f32.gmra.mxu0 %v777
      %v906 = vpop.f32.mrf.mxu0
      %v907 = vadd.f32 0.0, %v906
      %908 = vmatmul.f32.gmra.mxu0 %v780
      %v909 = vpop.f32.mrf.mxu0
      %v910 = vadd.f32 0.0, %v909
      %911 = vmatmul.f32.gmra.mxu0 %v783
      %v912 = vpop.f32.mrf.mxu0
      %v913 = vadd.f32 0.0, %v912
      %914 = vmatmul.f32.gmra.mxu0 %v786
      %v915 = vpop.f32.mrf.mxu0
      %v916 = vadd.f32 0.0, %v915
      %917 = vmatmul.f32.gmra.mxu0 %v789
      %v918 = vpop.f32.mrf.mxu0
      %v919 = vadd.f32 0.0, %v918
      %920 = vmatmul.f32.gmra.mxu0 %v792
      %v921 = vpop.f32.mrf.mxu0
      %v922 = vadd.f32 0.0, %v921
      %923 = vmatmul.f32.gmra.mxu0 %v795
      %v924 = vpop.f32.mrf.mxu0
      %v925 = vadd.f32 0.0, %v924
      %926 = vmatmul.f32.gmra.mxu0 %v798
      %v927 = vpop.f32.mrf.mxu0
      %v928 = vadd.f32 0.0, %v927
      %929 = vmatmul.f32.gmra.mxu0 %v801
      %v930 = vpop.f32.mrf.mxu0
      %v931 = vadd.f32 0.0, %v930
      %932 = vmatmul.f32.gmra.mxu0 %v804
      %v933 = vpop.f32.mrf.mxu0
      %v934 = vadd.f32 0.0, %v933
      %935 = vmatmul.f32.gmra.mxu0 %v807
      %v936 = vpop.f32.mrf.mxu0
      %v937 = vadd.f32 0.0, %v936
      %938 = vdwg.mxu0
      %v939 = vadd.f32 %v607, %v827
      %v940 = vadd.f32 %v672, %v892
      %v941 = vadd.f32 %v610, %v830
      %v942 = vadd.f32 %v675, %v895
      %v943 = vadd.f32 %v613, %v833
      %v944 = vadd.f32 %v678, %v898
      %v945 = vadd.f32 %v616, %v836
      %v946 = vadd.f32 %v681, %v901
      %v947 = vadd.f32 %v619, %v839
      %v948 = vadd.f32 %v684, %v904
      %v949 = vadd.f32 %v622, %v842
      %v950 = vadd.f32 %v687, %v907
      %v951 = vadd.f32 %v625, %v845
      %v952 = vadd.f32 %v690, %v910
      %v953 = vadd.f32 %v628, %v848
      %v954 = vadd.f32 %v693, %v913
      %v955 = vadd.f32 %v631, %v851
      %v956 = vadd.f32 %v696, %v916
      %v957 = vadd.f32 %v634, %v854
      %v958 = vadd.f32 %v699, %v919
      %v959 = vadd.f32 %v637, %v857
      %v960 = vadd.f32 %v702, %v922
      %v961 = vadd.f32 %v640, %v860
      %v962 = vadd.f32 %v705, %v925
      %v963 = vadd.f32 %v643, %v863
      %v964 = vadd.f32 %v708, %v928
      %v965 = vadd.f32 %v646, %v866
      %v966 = vadd.f32 %v711, %v931
      %v967 = vadd.f32 %v649, %v869
      %v968 = vadd.f32 %v714, %v934
      %v969 = vadd.f32 %v652, %v872
      %v970 = vadd.f32 %v717, %v937
      %s971 = sadd.s32 %s196, 23
      %s972 = scalar_lea.vmem %s184, %s971
      %v973 = vld [vmem:[%s972] sm:$0xff]
      %v974 = vld [vmem:[%s972 + $0x8] sm:$0xff]
      %v975 = vld [vmem:[%s972 + $0x10] sm:$0xff]
      %v976 = vld [vmem:[%s972 + $0x18] sm:$0xff]
      %v977 = vld [vmem:[%s972 + $0x20] sm:$0xff]
      %v978 = vld [vmem:[%s972 + $0x28] sm:$0xff]
      %v979 = vld [vmem:[%s972 + $0x30] sm:$0xff]
      %v980 = vld [vmem:[%s972 + $0x38] sm:$0xff]
      %v981 = vld [vmem:[%s972 + $0x40] sm:$0xff]
      %v982 = vld [vmem:[%s972 + $0x48] sm:$0xff]
      %v983 = vld [vmem:[%s972 + $0x50] sm:$0xff]
      %v984 = vld [vmem:[%s972 + $0x58] sm:$0xff]
      %v985 = vld [vmem:[%s972 + $0x60] sm:$0xff]
      %v986 = vld [vmem:[%s972 + $0x68] sm:$0xff]
      %v987 = vld [vmem:[%s972 + $0x70] sm:$0xff]
      %v988 = vld [vmem:[%s972 + $0x78] sm:$0xff]
      %v989 = vmul.f32 %v973, %v246
      %v990 = vmul.f32 %v974, %v247
      %v991 = vmul.f32 %v975, %v248
      %v992 = vmul.f32 %v976, %v249
      %v993 = vmul.f32 %v977, %v250
      %v994 = vmul.f32 %v978, %v251
      %v995 = vmul.f32 %v979, %v252
      %v996 = vmul.f32 %v980, %v253
      %v997 = vmul.f32 %v981, %v254
      %v998 = vmul.f32 %v982, %v255
      %v999 = vmul.f32 %v983, %v256
      %v1000 = vmul.f32 %v984, %v257
      %v1001 = vmul.f32 %v985, %v258
      %v1002 = vmul.f32 %v986, %v259
      %v1003 = vmul.f32 %v987, %v260
      %v1004 = vmul.f32 %v988, %v261
      %v1005 = vld [vmem:[%s1 + $0xc0] sm:$0xff]
      %v1006 = vld [vmem:[%s1 + $0xc8] sm:$0xff]
      %v1007 = vld [vmem:[%s1 + $0xd0] sm:$0xff]
      %v1008 = vld [vmem:[%s1 + $0xd8] sm:$0xff]
      %v1009 = vld [vmem:[%s1 + $0xe0] sm:$0xff]
      %v1010 = vld [vmem:[%s1 + $0xe8] sm:$0xff]
      %v1011 = vld [vmem:[%s1 + $0xf0] sm:$0xff]
      %v1012 = vld [vmem:[%s1 + $0xf8] sm:$0xff]
      %v1014 = vsel %vm362, %v989, 0
      %v1017 = vsel %vm362, %v990, 0
      %v1020 = vsel %vm362, %v991, 0
      %v1023 = vsel %vm362, %v992, 0
      %v1026 = vsel %vm362, %v993, 0
      %v1029 = vsel %vm362, %v994, 0
      %v1032 = vsel %vm362, %v995, 0
      %v1035 = vsel %vm362, %v996, 0
      %v1038 = vsel %vm362, %v997, 0
      %v1041 = vsel %vm362, %v998, 0
      %v1044 = vsel %vm362, %v999, 0
      %v1047 = vsel %vm362, %v1000, 0
      %v1050 = vsel %vm362, %v1001, 0
      %v1053 = vsel %vm362, %v1002, 0
      %v1056 = vsel %vm362, %v1003, 0
      %v1059 = vsel %vm362, %v1004, 0
      %1061 = vmatpush.msra.mxu0 0.0
      %1062 = vmatpush.msra.mxu0 0.0
      %1063 = vmatpush.msra.mxu0 0.0
      %1064 = vmatpush.msra.mxu0 0.0
      %1065 = vmatpush.msra.mxu0 0.0
      %1066 = vmatpush.msra.mxu0 0.0
      %1067 = vmatpush.msra.mxu0 0.0
      %1068 = vmatpush.msra.mxu0 0.0
      %1069 = vmatpush.msra.mxu0 0.0
      %1070 = vmatpush.msra.mxu0 0.0
      %1071 = vmatpush.msra.mxu0 0.0
      %1072 = vmatpush.msra.mxu0 0.0
      %1073 = vmatpush.msra.mxu0 %v1011
      %1074 = vmatpush.msra.mxu0 %v1009
      %1075 = vmatpush.msra.mxu0 %v1007
      %1076 = vmatpush.msra.mxu0 %v1005
      %1077 = vmatmul.f32.gmra.mxu0 %v1014
      %v1078 = vpop.f32.mrf.mxu0
      %v1079 = vadd.f32 0.0, %v1078
      %1080 = vmatmul.f32.gmra.mxu0 %v1017
      %v1081 = vpop.f32.mrf.mxu0
      %v1082 = vadd.f32 0.0, %v1081
      %1083 = vmatmul.f32.gmra.mxu0 %v1020
      %v1084 = vpop.f32.mrf.mxu0
      %v1085 = vadd.f32 0.0, %v1084
      %1086 = vmatmul.f32.gmra.mxu0 %v1023
      %v1087 = vpop.f32.mrf.mxu0
      %v1088 = vadd.f32 0.0, %v1087
      %1089 = vmatmul.f32.gmra.mxu0 %v1026
      %v1090 = vpop.f32.mrf.mxu0
      %v1091 = vadd.f32 0.0, %v1090
      %1092 = vmatmul.f32.gmra.mxu0 %v1029
      %v1093 = vpop.f32.mrf.mxu0
      %v1094 = vadd.f32 0.0, %v1093
      %1095 = vmatmul.f32.gmra.mxu0 %v1032
      %v1096 = vpop.f32.mrf.mxu0
      %v1097 = vadd.f32 0.0, %v1096
      %1098 = vmatmul.f32.gmra.mxu0 %v1035
      %v1099 = vpop.f32.mrf.mxu0
      %v1100 = vadd.f32 0.0, %v1099
      %1101 = vmatmul.f32.gmra.mxu0 %v1038
      %v1102 = vpop.f32.mrf.mxu0
      %v1103 = vadd.f32 0.0, %v1102
      %1104 = vmatmul.f32.gmra.mxu0 %v1041
      %v1105 = vpop.f32.mrf.mxu0
      %v1106 = vadd.f32 0.0, %v1105
      %1107 = vmatmul.f32.gmra.mxu0 %v1044
      %v1108 = vpop.f32.mrf.mxu0
      %v1109 = vadd.f32 0.0, %v1108
      %1110 = vmatmul.f32.gmra.mxu0 %v1047
      %v1111 = vpop.f32.mrf.mxu0
      %v1112 = vadd.f32 0.0, %v1111
      %1113 = vmatmul.f32.gmra.mxu0 %v1050
      %v1114 = vpop.f32.mrf.mxu0
      %v1115 = vadd.f32 0.0, %v1114
      %1116 = vmatmul.f32.gmra.mxu0 %v1053
      %v1117 = vpop.f32.mrf.mxu0
      %v1118 = vadd.f32 0.0, %v1117
      %1119 = vmatmul.f32.gmra.mxu0 %v1056
      %v1120 = vpop.f32.mrf.mxu0
      %v1121 = vadd.f32 0.0, %v1120
      %1122 = vmatmul.f32.gmra.mxu0 %v1059
      %v1123 = vpop.f32.mrf.mxu0
      %v1124 = vadd.f32 0.0, %v1123
      %1125 = vdwg.mxu0
      %1126 = vmatpush.msra.mxu0 0.0
      %1127 = vmatpush.msra.mxu0 0.0
      %1128 = vmatpush.msra.mxu0 0.0
      %1129 = vmatpush.msra.mxu0 0.0
      %1130 = vmatpush.msra.mxu0 0.0
      %1131 = vmatpush.msra.mxu0 0.0
      %1132 = vmatpush.msra.mxu0 0.0
      %1133 = vmatpush.msra.mxu0 0.0
      %1134 = vmatpush.msra.mxu0 0.0
      %1135 = vmatpush.msra.mxu0 0.0
      %1136 = vmatpush.msra.mxu0 0.0
      %1137 = vmatpush.msra.mxu0 0.0
      %1138 = vmatpush.msra.mxu0 %v1012
      %1139 = vmatpush.msra.mxu0 %v1010
      %1140 = vmatpush.msra.mxu0 %v1008
      %1141 = vmatpush.msra.mxu0 %v1006
      %1142 = vmatmul.f32.gmra.mxu0 %v1014
      %v1143 = vpop.f32.mrf.mxu0
      %v1144 = vadd.f32 0.0, %v1143
      %1145 = vmatmul.f32.gmra.mxu0 %v1017
      %v1146 = vpop.f32.mrf.mxu0
      %v1147 = vadd.f32 0.0, %v1146
      %1148 = vmatmul.f32.gmra.mxu0 %v1020
      %v1149 = vpop.f32.mrf.mxu0
      %v1150 = vadd.f32 0.0, %v1149
      %1151 = vmatmul.f32.gmra.mxu0 %v1023
      %v1152 = vpop.f32.mrf.mxu0
      %v1153 = vadd.f32 0.0, %v1152
      %1154 = vmatmul.f32.gmra.mxu0 %v1026
      %v1155 = vpop.f32.mrf.mxu0
      %v1156 = vadd.f32 0.0, %v1155
      %1157 = vmatmul.f32.gmra.mxu0 %v1029
      %v1158 = vpop.f32.mrf.mxu0
      %v1159 = vadd.f32 0.0, %v1158
      %1160 = vmatmul.f32.gmra.mxu0 %v1032
      %v1161 = vpop.f32.mrf.mxu0
      %v1162 = vadd.f32 0.0, %v1161
      %1163 = vmatmul.f32.gmra.mxu0 %v1035
      %v1164 = vpop.f32.mrf.mxu0
      %v1165 = vadd.f32 0.0, %v1164
      %1166 = vmatmul.f32.gmra.mxu0 %v1038
      %v1167 = vpop.f32.mrf.mxu0
      %v1168 = vadd.f32 0.0, %v1167
      %1169 = vmatmul.f32.gmra.mxu0 %v1041
      %v1170 = vpop.f32.mrf.mxu0
      %v1171 = vadd.f32 0.0, %v1170
      %1172 = vmatmul.f32.gmra.mxu0 %v1044
      %v1173 = vpop.f32.mrf.mxu0
      %v1174 = vadd.f32 0.0, %v1173
      %1175 = vmatmul.f32.gmra.mxu0 %v1047
      %v1176 = vpop.f32.mrf.mxu0
      %v1177 = vadd.f32 0.0, %v1176
      %1178 = vmatmul.f32.gmra.mxu0 %v1050
      %v1179 = vpop.f32.mrf.mxu0
      %v1180 = vadd.f32 0.0, %v1179
      %1181 = vmatmul.f32.gmra.mxu0 %v1053
      %v1182 = vpop.f32.mrf.mxu0
      %v1183 = vadd.f32 0.0, %v1182
      %1184 = vmatmul.f32.gmra.mxu0 %v1056
      %v1185 = vpop.f32.mrf.mxu0
      %v1186 = vadd.f32 0.0, %v1185
      %1187 = vmatmul.f32.gmra.mxu0 %v1059
      %v1188 = vpop.f32.mrf.mxu0
      %v1189 = vadd.f32 0.0, %v1188
      %1190 = vdwg.mxu0
      %v1191 = vadd.f32 %v939, %v1079
      %v1192 = vadd.f32 %v940, %v1144
      %v1193 = vadd.f32 %v941, %v1082
      %v1194 = vadd.f32 %v942, %v1147
      %v1195 = vadd.f32 %v943, %v1085
      %v1196 = vadd.f32 %v944, %v1150
      %v1197 = vadd.f32 %v945, %v1088
      %v1198 = vadd.f32 %v946, %v1153
      %v1199 = vadd.f32 %v947, %v1091
      %v1200 = vadd.f32 %v948, %v1156
      %v1201 = vadd.f32 %v949, %v1094
      %v1202 = vadd.f32 %v950, %v1159
      %v1203 = vadd.f32 %v951, %v1097
      %v1204 = vadd.f32 %v952, %v1162
      %v1205 = vadd.f32 %v953, %v1100
      %v1206 = vadd.f32 %v954, %v1165
      %v1207 = vadd.f32 %v955, %v1103
      %v1208 = vadd.f32 %v956, %v1168
      %v1209 = vadd.f32 %v957, %v1106
      %v1210 = vadd.f32 %v958, %v1171
      %v1211 = vadd.f32 %v959, %v1109
      %v1212 = vadd.f32 %v960, %v1174
      %v1213 = vadd.f32 %v961, %v1112
      %v1214 = vadd.f32 %v962, %v1177
      %v1215 = vadd.f32 %v963, %v1115
      %v1216 = vadd.f32 %v964, %v1180
      %v1217 = vadd.f32 %v965, %v1118
      %v1218 = vadd.f32 %v966, %v1183
      %v1219 = vadd.f32 %v967, %v1121
      %v1220 = vadd.f32 %v968, %v1186
      %v1221 = vadd.f32 %v969, %v1124
      %v1222 = vadd.f32 %v970, %v1189
      %s1223 = sadd.s32 %s196, 24
      %s1224 = scalar_lea.vmem %s184, %s1223
      %v1225 = vld [vmem:[%s1224] sm:$0xff]
      %v1226 = vld [vmem:[%s1224 + $0x8] sm:$0xff]
      %v1227 = vld [vmem:[%s1224 + $0x10] sm:$0xff]
      %v1228 = vld [vmem:[%s1224 + $0x18] sm:$0xff]
      %v1229 = vld [vmem:[%s1224 + $0x20] sm:$0xff]
      %v1230 = vld [vmem:[%s1224 + $0x28] sm:$0xff]
      %v1231 = vld [vmem:[%s1224 + $0x30] sm:$0xff]
      %v1232 = vld [vmem:[%s1224 + $0x38] sm:$0xff]
      %v1233 = vld [vmem:[%s1224 + $0x40] sm:$0xff]
      %v1234 = vld [vmem:[%s1224 + $0x48] sm:$0xff]
      %v1235 = vld [vmem:[%s1224 + $0x50] sm:$0xff]
      %v1236 = vld [vmem:[%s1224 + $0x58] sm:$0xff]
      %v1237 = vld [vmem:[%s1224 + $0x60] sm:$0xff]
      %v1238 = vld [vmem:[%s1224 + $0x68] sm:$0xff]
      %v1239 = vld [vmem:[%s1224 + $0x70] sm:$0xff]
      %v1240 = vld [vmem:[%s1224 + $0x78] sm:$0xff]
      %v1241 = vld [vmem:[%s1 + $0x100] sm:$0xff]
      %v1242 = vld [vmem:[%s1 + $0x108] sm:$0xff]
      %v1243 = vld [vmem:[%s1 + $0x110] sm:$0xff]
      %v1244 = vld [vmem:[%s1 + $0x118] sm:$0xff]
      %v1245 = vld [vmem:[%s1 + $0x120] sm:$0xff]
      %v1246 = vld [vmem:[%s1 + $0x128] sm:$0xff]
      %v1247 = vld [vmem:[%s1 + $0x130] sm:$0xff]
      %v1248 = vld [vmem:[%s1 + $0x138] sm:$0xff]
      %v1250 = vsel %vm362, %v1225, 0
      %v1253 = vsel %vm362, %v1226, 0
      %v1256 = vsel %vm362, %v1227, 0
      %v1259 = vsel %vm362, %v1228, 0
      %v1262 = vsel %vm362, %v1229, 0
      %v1265 = vsel %vm362, %v1230, 0
      %v1268 = vsel %vm362, %v1231, 0
      %v1271 = vsel %vm362, %v1232, 0
      %v1274 = vsel %vm362, %v1233, 0
      %v1277 = vsel %vm362, %v1234, 0
      %v1280 = vsel %vm362, %v1235, 0
      %v1283 = vsel %vm362, %v1236, 0
      %v1286 = vsel %vm362, %v1237, 0
      %v1289 = vsel %vm362, %v1238, 0
      %v1292 = vsel %vm362, %v1239, 0
      %v1295 = vsel %vm362, %v1240, 0
      %1297 = vmatpush.msra.mxu0 0.0
      %1298 = vmatpush.msra.mxu0 0.0
      %1299 = vmatpush.msra.mxu0 0.0
      %1300 = vmatpush.msra.mxu0 0.0
      %1301 = vmatpush.msra.mxu0 0.0
      %1302 = vmatpush.msra.mxu0 0.0
      %1303 = vmatpush.msra.mxu0 0.0
      %1304 = vmatpush.msra.mxu0 0.0
      %1305 = vmatpush.msra.mxu0 0.0
      %1306 = vmatpush.msra.mxu0 0.0
      %1307 = vmatpush.msra.mxu0 0.0
      %1308 = vmatpush.msra.mxu0 0.0
      %1309 = vmatpush.msra.mxu0 %v1247
      %1310 = vmatpush.msra.mxu0 %v1245
      %1311 = vmatpush.msra.mxu0 %v1243
      %1312 = vmatpush.msra.mxu0 %v1241
      %1313 = vmatmul.f32.gmra.mxu0 %v1250
      %v1314 = vpop.f32.mrf.mxu0
      %v1315 = vadd.f32 0.0, %v1314
      %1316 = vmatmul.f32.gmra.mxu0 %v1253
      %v1317 = vpop.f32.mrf.mxu0
      %v1318 = vadd.f32 0.0, %v1317
      %1319 = vmatmul.f32.gmra.mxu0 %v1256
      %v1320 = vpop.f32.mrf.mxu0
      %v1321 = vadd.f32 0.0, %v1320
      %1322 = vmatmul.f32.gmra.mxu0 %v1259
      %v1323 = vpop.f32.mrf.mxu0
      %v1324 = vadd.f32 0.0, %v1323
      %1325 = vmatmul.f32.gmra.mxu0 %v1262
      %v1326 = vpop.f32.mrf.mxu0
      %v1327 = vadd.f32 0.0, %v1326
      %1328 = vmatmul.f32.gmra.mxu0 %v1265
      %v1329 = vpop.f32.mrf.mxu0
      %v1330 = vadd.f32 0.0, %v1329
      %1331 = vmatmul.f32.gmra.mxu0 %v1268
      %v1332 = vpop.f32.mrf.mxu0
      %v1333 = vadd.f32 0.0, %v1332
      %1334 = vmatmul.f32.gmra.mxu0 %v1271
      %v1335 = vpop.f32.mrf.mxu0
      %v1336 = vadd.f32 0.0, %v1335
      %1337 = vmatmul.f32.gmra.mxu0 %v1274
      %v1338 = vpop.f32.mrf.mxu0
      %v1339 = vadd.f32 0.0, %v1338
      %1340 = vmatmul.f32.gmra.mxu0 %v1277
      %v1341 = vpop.f32.mrf.mxu0
      %v1342 = vadd.f32 0.0, %v1341
      %1343 = vmatmul.f32.gmra.mxu0 %v1280
      %v1344 = vpop.f32.mrf.mxu0
      %v1345 = vadd.f32 0.0, %v1344
      %1346 = vmatmul.f32.gmra.mxu0 %v1283
      %v1347 = vpop.f32.mrf.mxu0
      %v1348 = vadd.f32 0.0, %v1347
      %1349 = vmatmul.f32.gmra.mxu0 %v1286
      %v1350 = vpop.f32.mrf.mxu0
      %v1351 = vadd.f32 0.0, %v1350
      %1352 = vmatmul.f32.gmra.mxu0 %v1289
      %v1353 = vpop.f32.mrf.mxu0
      %v1354 = vadd.f32 0.0, %v1353
      %1355 = vmatmul.f32.gmra.mxu0 %v1292
      %v1356 = vpop.f32.mrf.mxu0
      %v1357 = vadd.f32 0.0, %v1356
      %1358 = vmatmul.f32.gmra.mxu0 %v1295
      %v1359 = vpop.f32.mrf.mxu0
      %v1360 = vadd.f32 0.0, %v1359
      %1361 = vdwg.mxu0
      %1362 = vmatpush.msra.mxu0 0.0
      %1363 = vmatpush.msra.mxu0 0.0
      %1364 = vmatpush.msra.mxu0 0.0
      %1365 = vmatpush.msra.mxu0 0.0
      %1366 = vmatpush.msra.mxu0 0.0
      %1367 = vmatpush.msra.mxu0 0.0
      %1368 = vmatpush.msra.mxu0 0.0
      %1369 = vmatpush.msra.mxu0 0.0
      %1370 = vmatpush.msra.mxu0 0.0
      %1371 = vmatpush.msra.mxu0 0.0
      %1372 = vmatpush.msra.mxu0 0.0
      %1373 = vmatpush.msra.mxu0 0.0
      %1374 = vmatpush.msra.mxu0 %v1248
      %1375 = vmatpush.msra.mxu0 %v1246
      %1376 = vmatpush.msra.mxu0 %v1244
      %1377 = vmatpush.msra.mxu0 %v1242
      %1378 = vmatmul.f32.gmra.mxu0 %v1250
      %v1379 = vpop.f32.mrf.mxu0
      %v1380 = vadd.f32 0.0, %v1379
      %1381 = vmatmul.f32.gmra.mxu0 %v1253
      %v1382 = vpop.f32.mrf.mxu0
      %v1383 = vadd.f32 0.0, %v1382
      %1384 = vmatmul.f32.gmra.mxu0 %v1256
      %v1385 = vpop.f32.mrf.mxu0
      %v1386 = vadd.f32 0.0, %v1385
      %1387 = vmatmul.f32.gmra.mxu0 %v1259
      %v1388 = vpop.f32.mrf.mxu0
      %v1389 = vadd.f32 0.0, %v1388
      %1390 = vmatmul.f32.gmra.mxu0 %v1262
      %v1391 = vpop.f32.mrf.mxu0
      %v1392 = vadd.f32 0.0, %v1391
      %1393 = vmatmul.f32.gmra.mxu0 %v1265
      %v1394 = vpop.f32.mrf.mxu0
      %v1395 = vadd.f32 0.0, %v1394
      %1396 = vmatmul.f32.gmra.mxu0 %v1268
      %v1397 = vpop.f32.mrf.mxu0
      %v1398 = vadd.f32 0.0, %v1397
      %1399 = vmatmul.f32.gmra.mxu0 %v1271
      %v1400 = vpop.f32.mrf.mxu0
      %v1401 = vadd.f32 0.0, %v1400
      %1402 = vmatmul.f32.gmra.mxu0 %v1274
      %v1403 = vpop.f32.mrf.mxu0
      %v1404 = vadd.f32 0.0, %v1403
      %1405 = vmatmul.f32.gmra.mxu0 %v1277
      %v1406 = vpop.f32.mrf.mxu0
      %v1407 = vadd.f32 0.0, %v1406
      %1408 = vmatmul.f32.gmra.mxu0 %v1280
      %v1409 = vpop.f32.mrf.mxu0
      %v1410 = vadd.f32 0.0, %v1409
      %1411 = vmatmul.f32.gmra.mxu0 %v1283
      %v1412 = vpop.f32.mrf.mxu0
      %v1413 = vadd.f32 0.0, %v1412
      %1414 = vmatmul.f32.gmra.mxu0 %v1286
      %v1415 = vpop.f32.mrf.mxu0
      %v1416 = vadd.f32 0.0, %v1415
      %1417 = vmatmul.f32.gmra.mxu0 %v1289
      %v1418 = vpop.f32.mrf.mxu0
      %v1419 = vadd.f32 0.0, %v1418
      %1420 = vmatmul.f32.gmra.mxu0 %v1292
      %v1421 = vpop.f32.mrf.mxu0
      %v1422 = vadd.f32 0.0, %v1421
      %1423 = vmatmul.f32.gmra.mxu0 %v1295
      %v1424 = vpop.f32.mrf.mxu0
      %v1425 = vadd.f32 0.0, %v1424
      %1426 = vdwg.mxu0
      %v1427 = vadd.f32 %v1191, %v1315
      %v1428 = vadd.f32 %v1192, %v1380
      %v1429 = vadd.f32 %v1193, %v1318
      %v1430 = vadd.f32 %v1194, %v1383
      %v1431 = vadd.f32 %v1195, %v1321
      %v1432 = vadd.f32 %v1196, %v1386
      %v1433 = vadd.f32 %v1197, %v1324
      %v1434 = vadd.f32 %v1198, %v1389
      %v1435 = vadd.f32 %v1199, %v1327
      %v1436 = vadd.f32 %v1200, %v1392
      %v1437 = vadd.f32 %v1201, %v1330
      %v1438 = vadd.f32 %v1202, %v1395
      %v1439 = vadd.f32 %v1203, %v1333
      %v1440 = vadd.f32 %v1204, %v1398
      %v1441 = vadd.f32 %v1205, %v1336
      %v1442 = vadd.f32 %v1206, %v1401
      %v1443 = vadd.f32 %v1207, %v1339
      %v1444 = vadd.f32 %v1208, %v1404
      %v1445 = vadd.f32 %v1209, %v1342
      %v1446 = vadd.f32 %v1210, %v1407
      %v1447 = vadd.f32 %v1211, %v1345
      %v1448 = vadd.f32 %v1212, %v1410
      %v1449 = vadd.f32 %v1213, %v1348
      %v1450 = vadd.f32 %v1214, %v1413
      %v1451 = vadd.f32 %v1215, %v1351
      %v1452 = vadd.f32 %v1216, %v1416
      %v1453 = vadd.f32 %v1217, %v1354
      %v1454 = vadd.f32 %v1218, %v1419
      %v1455 = vadd.f32 %v1219, %v1357
      %v1456 = vadd.f32 %v1220, %v1422
      %v1457 = vadd.f32 %v1221, %v1360
      %v1458 = vadd.f32 %v1222, %v1425
      %s1459 = sadd.s32 %s196, 25
      %s1460 = scalar_lea.vmem %s184, %s1459
      %v1461 = vld [vmem:[%s1460] sm:$0xff]
      %v1462 = vld [vmem:[%s1460 + $0x8] sm:$0xff]
      %v1463 = vld [vmem:[%s1460 + $0x10] sm:$0xff]
      %v1464 = vld [vmem:[%s1460 + $0x18] sm:$0xff]
      %v1465 = vld [vmem:[%s1460 + $0x20] sm:$0xff]
      %v1466 = vld [vmem:[%s1460 + $0x28] sm:$0xff]
      %v1467 = vld [vmem:[%s1460 + $0x30] sm:$0xff]
      %v1468 = vld [vmem:[%s1460 + $0x38] sm:$0xff]
      %v1469 = vld [vmem:[%s1460 + $0x40] sm:$0xff]
      %v1470 = vld [vmem:[%s1460 + $0x48] sm:$0xff]
      %v1471 = vld [vmem:[%s1460 + $0x50] sm:$0xff]
      %v1472 = vld [vmem:[%s1460 + $0x58] sm:$0xff]
      %v1473 = vld [vmem:[%s1460 + $0x60] sm:$0xff]
      %v1474 = vld [vmem:[%s1460 + $0x68] sm:$0xff]
      %v1475 = vld [vmem:[%s1460 + $0x70] sm:$0xff]
      %v1476 = vld [vmem:[%s1460 + $0x78] sm:$0xff]
      %v1477 = vmul.f32 %v1461, %v278
      %v1478 = vmul.f32 %v1462, %v279
      %v1479 = vmul.f32 %v1463, %v280
      %v1480 = vmul.f32 %v1464, %v281
      %v1481 = vmul.f32 %v1465, %v282
      %v1482 = vmul.f32 %v1466, %v283
      %v1483 = vmul.f32 %v1467, %v284
      %v1484 = vmul.f32 %v1468, %v285
      %v1485 = vmul.f32 %v1469, %v286
      %v1486 = vmul.f32 %v1470, %v287
      %v1487 = vmul.f32 %v1471, %v288
      %v1488 = vmul.f32 %v1472, %v289
      %v1489 = vmul.f32 %v1473, %v290
      %v1490 = vmul.f32 %v1474, %v291
      %v1491 = vmul.f32 %v1475, %v292
      %v1492 = vmul.f32 %v1476, %v293
      %v1493 = vld [vmem:[%s1 + $0x140] sm:$0xff]
      %v1494 = vld [vmem:[%s1 + $0x148] sm:$0xff]
      %v1495 = vld [vmem:[%s1 + $0x150] sm:$0xff]
      %v1496 = vld [vmem:[%s1 + $0x158] sm:$0xff]
      %v1497 = vld [vmem:[%s1 + $0x160] sm:$0xff]
      %v1498 = vld [vmem:[%s1 + $0x168] sm:$0xff]
      %v1499 = vld [vmem:[%s1 + $0x170] sm:$0xff]
      %v1500 = vld [vmem:[%s1 + $0x178] sm:$0xff]
      %v1502 = vsel %vm362, %v1477, 0
      %v1505 = vsel %vm362, %v1478, 0
      %v1508 = vsel %vm362, %v1479, 0
      %v1511 = vsel %vm362, %v1480, 0
      %v1514 = vsel %vm362, %v1481, 0
      %v1517 = vsel %vm362, %v1482, 0
      %v1520 = vsel %vm362, %v1483, 0
      %v1523 = vsel %vm362, %v1484, 0
      %v1526 = vsel %vm362, %v1485, 0
      %v1529 = vsel %vm362, %v1486, 0
      %v1532 = vsel %vm362, %v1487, 0
      %v1535 = vsel %vm362, %v1488, 0
      %v1538 = vsel %vm362, %v1489, 0
      %v1541 = vsel %vm362, %v1490, 0
      %v1544 = vsel %vm362, %v1491, 0
      %v1547 = vsel %vm362, %v1492, 0
      %1549 = vmatpush.msra.mxu0 0.0
      %1550 = vmatpush.msra.mxu0 0.0
      %1551 = vmatpush.msra.mxu0 0.0
      %1552 = vmatpush.msra.mxu0 0.0
      %1553 = vmatpush.msra.mxu0 0.0
      %1554 = vmatpush.msra.mxu0 0.0
      %1555 = vmatpush.msra.mxu0 0.0
      %1556 = vmatpush.msra.mxu0 0.0
      %1557 = vmatpush.msra.mxu0 0.0
      %1558 = vmatpush.msra.mxu0 0.0
      %1559 = vmatpush.msra.mxu0 0.0
      %1560 = vmatpush.msra.mxu0 0.0
      %1561 = vmatpush.msra.mxu0 %v1499
      %1562 = vmatpush.msra.mxu0 %v1497
      %1563 = vmatpush.msra.mxu0 %v1495
      %1564 = vmatpush.msra.mxu0 %v1493
      %1565 = vmatmul.f32.gmra.mxu0 %v1502
      %v1566 = vpop.f32.mrf.mxu0
      %v1567 = vadd.f32 0.0, %v1566
      %1568 = vmatmul.f32.gmra.mxu0 %v1505
      %v1569 = vpop.f32.mrf.mxu0
      %v1570 = vadd.f32 0.0, %v1569
      %1571 = vmatmul.f32.gmra.mxu0 %v1508
      %v1572 = vpop.f32.mrf.mxu0
      %v1573 = vadd.f32 0.0, %v1572
      %1574 = vmatmul.f32.gmra.mxu0 %v1511
      %v1575 = vpop.f32.mrf.mxu0
      %v1576 = vadd.f32 0.0, %v1575
      %1577 = vmatmul.f32.gmra.mxu0 %v1514
      %v1578 = vpop.f32.mrf.mxu0
      %v1579 = vadd.f32 0.0, %v1578
      %1580 = vmatmul.f32.gmra.mxu0 %v1517
      %v1581 = vpop.f32.mrf.mxu0
      %v1582 = vadd.f32 0.0, %v1581
      %1583 = vmatmul.f32.gmra.mxu0 %v1520
      %v1584 = vpop.f32.mrf.mxu0
      %v1585 = vadd.f32 0.0, %v1584
      %1586 = vmatmul.f32.gmra.mxu0 %v1523
      %v1587 = vpop.f32.mrf.mxu0
      %v1588 = vadd.f32 0.0, %v1587
      %1589 = vmatmul.f32.gmra.mxu0 %v1526
      %v1590 = vpop.f32.mrf.mxu0
      %v1591 = vadd.f32 0.0, %v1590
      %1592 = vmatmul.f32.gmra.mxu0 %v1529
      %v1593 = vpop.f32.mrf.mxu0
      %v1594 = vadd.f32 0.0, %v1593
      %1595 = vmatmul.f32.gmra.mxu0 %v1532
      %v1596 = vpop.f32.mrf.mxu0
      %v1597 = vadd.f32 0.0, %v1596
      %1598 = vmatmul.f32.gmra.mxu0 %v1535
      %v1599 = vpop.f32.mrf.mxu0
      %v1600 = vadd.f32 0.0, %v1599
      %1601 = vmatmul.f32.gmra.mxu0 %v1538
      %v1602 = vpop.f32.mrf.mxu0
      %v1603 = vadd.f32 0.0, %v1602
      %1604 = vmatmul.f32.gmra.mxu0 %v1541
      %v1605 = vpop.f32.mrf.mxu0
      %v1606 = vadd.f32 0.0, %v1605
      %1607 = vmatmul.f32.gmra.mxu0 %v1544
      %v1608 = vpop.f32.mrf.mxu0
      %v1609 = vadd.f32 0.0, %v1608
      %1610 = vmatmul.f32.gmra.mxu0 %v1547
      %v1611 = vpop.f32.mrf.mxu0
      %v1612 = vadd.f32 0.0, %v1611
      %1613 = vdwg.mxu0
      %1614 = vmatpush.msra.mxu0 0.0
      %1615 = vmatpush.msra.mxu0 0.0
      %1616 = vmatpush.msra.mxu0 0.0
      %1617 = vmatpush.msra.mxu0 0.0
      %1618 = vmatpush.msra.mxu0 0.0
      %1619 = vmatpush.msra.mxu0 0.0
      %1620 = vmatpush.msra.mxu0 0.0
      %1621 = vmatpush.msra.mxu0 0.0
      %1622 = vmatpush.msra.mxu0 0.0
      %1623 = vmatpush.msra.mxu0 0.0
      %1624 = vmatpush.msra.mxu0 0.0
      %1625 = vmatpush.msra.mxu0 0.0
      %1626 = vmatpush.msra.mxu0 %v1500
      %1627 = vmatpush.msra.mxu0 %v1498
      %1628 = vmatpush.msra.mxu0 %v1496
      %1629 = vmatpush.msra.mxu0 %v1494
      %1630 = vmatmul.f32.gmra.mxu0 %v1502
      %v1631 = vpop.f32.mrf.mxu0
      %v1632 = vadd.f32 0.0, %v1631
      %1633 = vmatmul.f32.gmra.mxu0 %v1505
      %v1634 = vpop.f32.mrf.mxu0
      %v1635 = vadd.f32 0.0, %v1634
      %1636 = vmatmul.f32.gmra.mxu0 %v1508
      %v1637 = vpop.f32.mrf.mxu0
      %v1638 = vadd.f32 0.0, %v1637
      %1639 = vmatmul.f32.gmra.mxu0 %v1511
      %v1640 = vpop.f32.mrf.mxu0
      %v1641 = vadd.f32 0.0, %v1640
      %1642 = vmatmul.f32.gmra.mxu0 %v1514
      %v1643 = vpop.f32.mrf.mxu0
      %v1644 = vadd.f32 0.0, %v1643
      %1645 = vmatmul.f32.gmra.mxu0 %v1517
      %v1646 = vpop.f32.mrf.mxu0
      %v1647 = vadd.f32 0.0, %v1646
      %1648 = vmatmul.f32.gmra.mxu0 %v1520
      %v1649 = vpop.f32.mrf.mxu0
      %v1650 = vadd.f32 0.0, %v1649
      %1651 = vmatmul.f32.gmra.mxu0 %v1523
      %v1652 = vpop.f32.mrf.mxu0
      %v1653 = vadd.f32 0.0, %v1652
      %1654 = vmatmul.f32.gmra.mxu0 %v1526
      %v1655 = vpop.f32.mrf.mxu0
      %v1656 = vadd.f32 0.0, %v1655
      %1657 = vmatmul.f32.gmra.mxu0 %v1529
      %v1658 = vpop.f32.mrf.mxu0
      %v1659 = vadd.f32 0.0, %v1658
      %1660 = vmatmul.f32.gmra.mxu0 %v1532
      %v1661 = vpop.f32.mrf.mxu0
      %v1662 = vadd.f32 0.0, %v1661
      %1663 = vmatmul.f32.gmra.mxu0 %v1535
      %v1664 = vpop.f32.mrf.mxu0
      %v1665 = vadd.f32 0.0, %v1664
      %1666 = vmatmul.f32.gmra.mxu0 %v1538
      %v1667 = vpop.f32.mrf.mxu0
      %v1668 = vadd.f32 0.0, %v1667
      %1669 = vmatmul.f32.gmra.mxu0 %v1541
      %v1670 = vpop.f32.mrf.mxu0
      %v1671 = vadd.f32 0.0, %v1670
      %1672 = vmatmul.f32.gmra.mxu0 %v1544
      %v1673 = vpop.f32.mrf.mxu0
      %v1674 = vadd.f32 0.0, %v1673
      %1675 = vmatmul.f32.gmra.mxu0 %v1547
      %v1676 = vpop.f32.mrf.mxu0
      %v1677 = vadd.f32 0.0, %v1676
      %1678 = vdwg.mxu0
      %v1679 = vadd.f32 %v1427, %v1567
      %v1680 = vadd.f32 %v1428, %v1632
      %v1681 = vadd.f32 %v1429, %v1570
      %v1682 = vadd.f32 %v1430, %v1635
      %v1683 = vadd.f32 %v1431, %v1573
      %v1684 = vadd.f32 %v1432, %v1638
      %v1685 = vadd.f32 %v1433, %v1576
      %v1686 = vadd.f32 %v1434, %v1641
      %v1687 = vadd.f32 %v1435, %v1579
      %v1688 = vadd.f32 %v1436, %v1644
      %v1689 = vadd.f32 %v1437, %v1582
      %v1690 = vadd.f32 %v1438, %v1647
      %v1691 = vadd.f32 %v1439, %v1585
      %v1692 = vadd.f32 %v1440, %v1650
      %v1693 = vadd.f32 %v1441, %v1588
      %v1694 = vadd.f32 %v1442, %v1653
      %v1695 = vadd.f32 %v1443, %v1591
      %v1696 = vadd.f32 %v1444, %v1656
      %v1697 = vadd.f32 %v1445, %v1594
      %v1698 = vadd.f32 %v1446, %v1659
      %v1699 = vadd.f32 %v1447, %v1597
      %v1700 = vadd.f32 %v1448, %v1662
      %v1701 = vadd.f32 %v1449, %v1600
      %v1702 = vadd.f32 %v1450, %v1665
      %v1703 = vadd.f32 %v1451, %v1603
      %v1704 = vadd.f32 %v1452, %v1668
      %v1705 = vadd.f32 %v1453, %v1606
      %v1706 = vadd.f32 %v1454, %v1671
      %v1707 = vadd.f32 %v1455, %v1609
      %v1708 = vadd.f32 %v1456, %v1674
      %v1709 = vadd.f32 %v1457, %v1612
      %v1710 = vadd.f32 %v1458, %v1677
      %s1711 = sadd.s32 %s196, 39
      %s1712 = scalar_lea.vmem %s184, %s1711
      %v1713 = vld [vmem:[%s1712] sm:$0xff]
      %v1714 = vld [vmem:[%s1712 + $0x8] sm:$0xff]
      %v1715 = vld [vmem:[%s1712 + $0x10] sm:$0xff]
      %v1716 = vld [vmem:[%s1712 + $0x18] sm:$0xff]
      %v1717 = vld [vmem:[%s1712 + $0x20] sm:$0xff]
      %v1718 = vld [vmem:[%s1712 + $0x28] sm:$0xff]
      %v1719 = vld [vmem:[%s1712 + $0x30] sm:$0xff]
      %v1720 = vld [vmem:[%s1712 + $0x38] sm:$0xff]
      %v1721 = vld [vmem:[%s1712 + $0x40] sm:$0xff]
      %v1722 = vld [vmem:[%s1712 + $0x48] sm:$0xff]
      %v1723 = vld [vmem:[%s1712 + $0x50] sm:$0xff]
      %v1724 = vld [vmem:[%s1712 + $0x58] sm:$0xff]
      %v1725 = vld [vmem:[%s1712 + $0x60] sm:$0xff]
      %v1726 = vld [vmem:[%s1712 + $0x68] sm:$0xff]
      %v1727 = vld [vmem:[%s1712 + $0x70] sm:$0xff]
      %v1728 = vld [vmem:[%s1712 + $0x78] sm:$0xff]
      %v1729 = vmul.f32 %v1713, %v246
      %v1730 = vmul.f32 %v1714, %v247
      %v1731 = vmul.f32 %v1715, %v248
      %v1732 = vmul.f32 %v1716, %v249
      %v1733 = vmul.f32 %v1717, %v250
      %v1734 = vmul.f32 %v1718, %v251
      %v1735 = vmul.f32 %v1719, %v252
      %v1736 = vmul.f32 %v1720, %v253
      %v1737 = vmul.f32 %v1721, %v254
      %v1738 = vmul.f32 %v1722, %v255
      %v1739 = vmul.f32 %v1723, %v256
      %v1740 = vmul.f32 %v1724, %v257
      %v1741 = vmul.f32 %v1725, %v258
      %v1742 = vmul.f32 %v1726, %v259
      %v1743 = vmul.f32 %v1727, %v260
      %v1744 = vmul.f32 %v1728, %v261
      %v1745 = vld [vmem:[%s1 + $0x180] sm:$0xff]
      %v1746 = vld [vmem:[%s1 + $0x188] sm:$0xff]
      %v1747 = vld [vmem:[%s1 + $0x190] sm:$0xff]
      %v1748 = vld [vmem:[%s1 + $0x198] sm:$0xff]
      %v1749 = vld [vmem:[%s1 + $0x1a0] sm:$0xff]
      %v1750 = vld [vmem:[%s1 + $0x1a8] sm:$0xff]
      %v1751 = vld [vmem:[%s1 + $0x1b0] sm:$0xff]
      %v1752 = vld [vmem:[%s1 + $0x1b8] sm:$0xff]
      %v1754 = vsel %vm362, %v1729, 0
      %v1757 = vsel %vm362, %v1730, 0
      %v1760 = vsel %vm362, %v1731, 0
      %v1763 = vsel %vm362, %v1732, 0
      %v1766 = vsel %vm362, %v1733, 0
      %v1769 = vsel %vm362, %v1734, 0
      %v1772 = vsel %vm362, %v1735, 0
      %v1775 = vsel %vm362, %v1736, 0
      %v1778 = vsel %vm362, %v1737, 0
      %v1781 = vsel %vm362, %v1738, 0
      %v1784 = vsel %vm362, %v1739, 0
      %v1787 = vsel %vm362, %v1740, 0
      %v1790 = vsel %vm362, %v1741, 0
      %v1793 = vsel %vm362, %v1742, 0
      %v1796 = vsel %vm362, %v1743, 0
      %v1799 = vsel %vm362, %v1744, 0
      %1801 = vmatpush.msra.mxu0 0.0
      %1802 = vmatpush.msra.mxu0 0.0
      %1803 = vmatpush.msra.mxu0 0.0
      %1804 = vmatpush.msra.mxu0 0.0
      %1805 = vmatpush.msra.mxu0 0.0
      %1806 = vmatpush.msra.mxu0 0.0
      %1807 = vmatpush.msra.mxu0 0.0
      %1808 = vmatpush.msra.mxu0 0.0
      %1809 = vmatpush.msra.mxu0 0.0
      %1810 = vmatpush.msra.mxu0 0.0
      %1811 = vmatpush.msra.mxu0 0.0
      %1812 = vmatpush.msra.mxu0 0.0
      %1813 = vmatpush.msra.mxu0 %v1751
      %1814 = vmatpush.msra.mxu0 %v1749
      %1815 = vmatpush.msra.mxu0 %v1747
      %1816 = vmatpush.msra.mxu0 %v1745
      %1817 = vmatmul.f32.gmra.mxu0 %v1754
      %v1818 = vpop.f32.mrf.mxu0
      %v1819 = vadd.f32 0.0, %v1818
      %1820 = vmatmul.f32.gmra.mxu0 %v1757
      %v1821 = vpop.f32.mrf.mxu0
      %v1822 = vadd.f32 0.0, %v1821
      %1823 = vmatmul.f32.gmra.mxu0 %v1760
      %v1824 = vpop.f32.mrf.mxu0
      %v1825 = vadd.f32 0.0, %v1824
      %1826 = vmatmul.f32.gmra.mxu0 %v1763
      %v1827 = vpop.f32.mrf.mxu0
      %v1828 = vadd.f32 0.0, %v1827
      %1829 = vmatmul.f32.gmra.mxu0 %v1766
      %v1830 = vpop.f32.mrf.mxu0
      %v1831 = vadd.f32 0.0, %v1830
      %1832 = vmatmul.f32.gmra.mxu0 %v1769
      %v1833 = vpop.f32.mrf.mxu0
      %v1834 = vadd.f32 0.0, %v1833
      %1835 = vmatmul.f32.gmra.mxu0 %v1772
      %v1836 = vpop.f32.mrf.mxu0
      %v1837 = vadd.f32 0.0, %v1836
      %1838 = vmatmul.f32.gmra.mxu0 %v1775
      %v1839 = vpop.f32.mrf.mxu0
      %v1840 = vadd.f32 0.0, %v1839
      %1841 = vmatmul.f32.gmra.mxu0 %v1778
      %v1842 = vpop.f32.mrf.mxu0
      %v1843 = vadd.f32 0.0, %v1842
      %1844 = vmatmul.f32.gmra.mxu0 %v1781
      %v1845 = vpop.f32.mrf.mxu0
      %v1846 = vadd.f32 0.0, %v1845
      %1847 = vmatmul.f32.gmra.mxu0 %v1784
      %v1848 = vpop.f32.mrf.mxu0
      %v1849 = vadd.f32 0.0, %v1848
      %1850 = vmatmul.f32.gmra.mxu0 %v1787
      %v1851 = vpop.f32.mrf.mxu0
      %v1852 = vadd.f32 0.0, %v1851
      %1853 = vmatmul.f32.gmra.mxu0 %v1790
      %v1854 = vpop.f32.mrf.mxu0
      %v1855 = vadd.f32 0.0, %v1854
      %1856 = vmatmul.f32.gmra.mxu0 %v1793
      %v1857 = vpop.f32.mrf.mxu0
      %v1858 = vadd.f32 0.0, %v1857
      %1859 = vmatmul.f32.gmra.mxu0 %v1796
      %v1860 = vpop.f32.mrf.mxu0
      %v1861 = vadd.f32 0.0, %v1860
      %1862 = vmatmul.f32.gmra.mxu0 %v1799
      %v1863 = vpop.f32.mrf.mxu0
      %v1864 = vadd.f32 0.0, %v1863
      %1865 = vdwg.mxu0
      %1866 = vmatpush.msra.mxu0 0.0
      %1867 = vmatpush.msra.mxu0 0.0
      %1868 = vmatpush.msra.mxu0 0.0
      %1869 = vmatpush.msra.mxu0 0.0
      %1870 = vmatpush.msra.mxu0 0.0
      %1871 = vmatpush.msra.mxu0 0.0
      %1872 = vmatpush.msra.mxu0 0.0
      %1873 = vmatpush.msra.mxu0 0.0
      %1874 = vmatpush.msra.mxu0 0.0
      %1875 = vmatpush.msra.mxu0 0.0
      %1876 = vmatpush.msra.mxu0 0.0
      %1877 = vmatpush.msra.mxu0 0.0
      %1878 = vmatpush.msra.mxu0 %v1752
      %1879 = vmatpush.msra.mxu0 %v1750
      %1880 = vmatpush.msra.mxu0 %v1748
      %1881 = vmatpush.msra.mxu0 %v1746
      %1882 = vmatmul.f32.gmra.mxu0 %v1754
      %v1883 = vpop.f32.mrf.mxu0
      %v1884 = vadd.f32 0.0, %v1883
      %1885 = vmatmul.f32.gmra.mxu0 %v1757
      %v1886 = vpop.f32.mrf.mxu0
      %v1887 = vadd.f32 0.0, %v1886
      %1888 = vmatmul.f32.gmra.mxu0 %v1760
      %v1889 = vpop.f32.mrf.mxu0
      %v1890 = vadd.f32 0.0, %v1889
      %1891 = vmatmul.f32.gmra.mxu0 %v1763
      %v1892 = vpop.f32.mrf.mxu0
      %v1893 = vadd.f32 0.0, %v1892
      %1894 = vmatmul.f32.gmra.mxu0 %v1766
      %v1895 = vpop.f32.mrf.mxu0
      %v1896 = vadd.f32 0.0, %v1895
      %1897 = vmatmul.f32.gmra.mxu0 %v1769
      %v1898 = vpop.f32.mrf.mxu0
      %v1899 = vadd.f32 0.0, %v1898
      %1900 = vmatmul.f32.gmra.mxu0 %v1772
      %v1901 = vpop.f32.mrf.mxu0
      %v1902 = vadd.f32 0.0, %v1901
      %1903 = vmatmul.f32.gmra.mxu0 %v1775
      %v1904 = vpop.f32.mrf.mxu0
      %v1905 = vadd.f32 0.0, %v1904
      %1906 = vmatmul.f32.gmra.mxu0 %v1778
      %v1907 = vpop.f32.mrf.mxu0
      %v1908 = vadd.f32 0.0, %v1907
      %1909 = vmatmul.f32.gmra.mxu0 %v1781
      %v1910 = vpop.f32.mrf.mxu0
      %v1911 = vadd.f32 0.0, %v1910
      %1912 = vmatmul.f32.gmra.mxu0 %v1784
      %v1913 = vpop.f32.mrf.mxu0
      %v1914 = vadd.f32 0.0, %v1913
      %1915 = vmatmul.f32.gmra.mxu0 %v1787
      %v1916 = vpop.f32.mrf.mxu0
      %v1917 = vadd.f32 0.0, %v1916
      %1918 = vmatmul.f32.gmra.mxu0 %v1790
      %v1919 = vpop.f32.mrf.mxu0
      %v1920 = vadd.f32 0.0, %v1919
      %1921 = vmatmul.f32.gmra.mxu0 %v1793
      %v1922 = vpop.f32.mrf.mxu0
      %v1923 = vadd.f32 0.0, %v1922
      %1924 = vmatmul.f32.gmra.mxu0 %v1796
      %v1925 = vpop.f32.mrf.mxu0
      %v1926 = vadd.f32 0.0, %v1925
      %1927 = vmatmul.f32.gmra.mxu0 %v1799
      %v1928 = vpop.f32.mrf.mxu0
      %v1929 = vadd.f32 0.0, %v1928
      %1930 = vdwg.mxu0
      %v1931 = vadd.f32 %v1679, %v1819
      %v1932 = vadd.f32 %v1680, %v1884
      %v1933 = vadd.f32 %v1681, %v1822
      %v1934 = vadd.f32 %v1682, %v1887
      %v1935 = vadd.f32 %v1683, %v1825
      %v1936 = vadd.f32 %v1684, %v1890
      %v1937 = vadd.f32 %v1685, %v1828
      %v1938 = vadd.f32 %v1686, %v1893
      %v1939 = vadd.f32 %v1687, %v1831
      %v1940 = vadd.f32 %v1688, %v1896
      %v1941 = vadd.f32 %v1689, %v1834
      %v1942 = vadd.f32 %v1690, %v1899
      %v1943 = vadd.f32 %v1691, %v1837
      %v1944 = vadd.f32 %v1692, %v1902
      %v1945 = vadd.f32 %v1693, %v1840
      %v1946 = vadd.f32 %v1694, %v1905
      %v1947 = vadd.f32 %v1695, %v1843
      %v1948 = vadd.f32 %v1696, %v1908
      %v1949 = vadd.f32 %v1697, %v1846
      %v1950 = vadd.f32 %v1698, %v1911
      %v1951 = vadd.f32 %v1699, %v1849
      %v1952 = vadd.f32 %v1700, %v1914
      %v1953 = vadd.f32 %v1701, %v1852
      %v1954 = vadd.f32 %v1702, %v1917
      %v1955 = vadd.f32 %v1703, %v1855
      %v1956 = vadd.f32 %v1704, %v1920
      %v1957 = vadd.f32 %v1705, %v1858
      %v1958 = vadd.f32 %v1706, %v1923
      %v1959 = vadd.f32 %v1707, %v1861
      %v1960 = vadd.f32 %v1708, %v1926
      %v1961 = vadd.f32 %v1709, %v1864
      %v1962 = vadd.f32 %v1710, %v1929
      %s1963 = sadd.s32 %s196, 40
      %s1964 = scalar_lea.vmem %s184, %s1963
      %v1965 = vld [vmem:[%s1964] sm:$0xff]
      %v1966 = vld [vmem:[%s1964 + $0x8] sm:$0xff]
      %v1967 = vld [vmem:[%s1964 + $0x10] sm:$0xff]
      %v1968 = vld [vmem:[%s1964 + $0x18] sm:$0xff]
      %v1969 = vld [vmem:[%s1964 + $0x20] sm:$0xff]
      %v1970 = vld [vmem:[%s1964 + $0x28] sm:$0xff]
      %v1971 = vld [vmem:[%s1964 + $0x30] sm:$0xff]
      %v1972 = vld [vmem:[%s1964 + $0x38] sm:$0xff]
      %v1973 = vld [vmem:[%s1964 + $0x40] sm:$0xff]
      %v1974 = vld [vmem:[%s1964 + $0x48] sm:$0xff]
      %v1975 = vld [vmem:[%s1964 + $0x50] sm:$0xff]
      %v1976 = vld [vmem:[%s1964 + $0x58] sm:$0xff]
      %v1977 = vld [vmem:[%s1964 + $0x60] sm:$0xff]
      %v1978 = vld [vmem:[%s1964 + $0x68] sm:$0xff]
      %v1979 = vld [vmem:[%s1964 + $0x70] sm:$0xff]
      %v1980 = vld [vmem:[%s1964 + $0x78] sm:$0xff]
      %v1981 = vld [vmem:[%s1 + $0x1c0] sm:$0xff]
      %v1982 = vld [vmem:[%s1 + $0x1c8] sm:$0xff]
      %v1983 = vld [vmem:[%s1 + $0x1d0] sm:$0xff]
      %v1984 = vld [vmem:[%s1 + $0x1d8] sm:$0xff]
      %v1985 = vld [vmem:[%s1 + $0x1e0] sm:$0xff]
      %v1986 = vld [vmem:[%s1 + $0x1e8] sm:$0xff]
      %v1987 = vld [vmem:[%s1 + $0x1f0] sm:$0xff]
      %v1988 = vld [vmem:[%s1 + $0x1f8] sm:$0xff]
      %v1990 = vsel %vm362, %v1965, 0
      %v1993 = vsel %vm362, %v1966, 0
      %v1996 = vsel %vm362, %v1967, 0
      %v1999 = vsel %vm362, %v1968, 0
      %v2002 = vsel %vm362, %v1969, 0
      %v2005 = vsel %vm362, %v1970, 0
      %v2008 = vsel %vm362, %v1971, 0
      %v2011 = vsel %vm362, %v1972, 0
      %v2014 = vsel %vm362, %v1973, 0
      %v2017 = vsel %vm362, %v1974, 0
      %v2020 = vsel %vm362, %v1975, 0
      %v2023 = vsel %vm362, %v1976, 0
      %v2026 = vsel %vm362, %v1977, 0
      %v2029 = vsel %vm362, %v1978, 0
      %v2032 = vsel %vm362, %v1979, 0
      %v2035 = vsel %vm362, %v1980, 0
      %2037 = vmatpush.msra.mxu0 0.0
      %2038 = vmatpush.msra.mxu0 0.0
      %2039 = vmatpush.msra.mxu0 0.0
      %2040 = vmatpush.msra.mxu0 0.0
      %2041 = vmatpush.msra.mxu0 0.0
      %2042 = vmatpush.msra.mxu0 0.0
      %2043 = vmatpush.msra.mxu0 0.0
      %2044 = vmatpush.msra.mxu0 0.0
      %2045 = vmatpush.msra.mxu0 0.0
      %2046 = vmatpush.msra.mxu0 0.0
      %2047 = vmatpush.msra.mxu0 0.0
      %2048 = vmatpush.msra.mxu0 0.0
      %2049 = vmatpush.msra.mxu0 %v1987
      %2050 = vmatpush.msra.mxu0 %v1985
      %2051 = vmatpush.msra.mxu0 %v1983
      %2052 = vmatpush.msra.mxu0 %v1981
      %2053 = vmatmul.f32.gmra.mxu0 %v1990
      %v2054 = vpop.f32.mrf.mxu0
      %v2055 = vadd.f32 0.0, %v2054
      %2056 = vmatmul.f32.gmra.mxu0 %v1993
      %v2057 = vpop.f32.mrf.mxu0
      %v2058 = vadd.f32 0.0, %v2057
      %2059 = vmatmul.f32.gmra.mxu0 %v1996
      %v2060 = vpop.f32.mrf.mxu0
      %v2061 = vadd.f32 0.0, %v2060
      %2062 = vmatmul.f32.gmra.mxu0 %v1999
      %v2063 = vpop.f32.mrf.mxu0
      %v2064 = vadd.f32 0.0, %v2063
      %2065 = vmatmul.f32.gmra.mxu0 %v2002
      %v2066 = vpop.f32.mrf.mxu0
      %v2067 = vadd.f32 0.0, %v2066
      %2068 = vmatmul.f32.gmra.mxu0 %v2005
      %v2069 = vpop.f32.mrf.mxu0
      %v2070 = vadd.f32 0.0, %v2069
      %2071 = vmatmul.f32.gmra.mxu0 %v2008
      %v2072 = vpop.f32.mrf.mxu0
      %v2073 = vadd.f32 0.0, %v2072
      %2074 = vmatmul.f32.gmra.mxu0 %v2011
      %v2075 = vpop.f32.mrf.mxu0
      %v2076 = vadd.f32 0.0, %v2075
      %2077 = vmatmul.f32.gmra.mxu0 %v2014
      %v2078 = vpop.f32.mrf.mxu0
      %v2079 = vadd.f32 0.0, %v2078
      %2080 = vmatmul.f32.gmra.mxu0 %v2017
      %v2081 = vpop.f32.mrf.mxu0
      %v2082 = vadd.f32 0.0, %v2081
      %2083 = vmatmul.f32.gmra.mxu0 %v2020
      %v2084 = vpop.f32.mrf.mxu0
      %v2085 = vadd.f32 0.0, %v2084
      %2086 = vmatmul.f32.gmra.mxu0 %v2023
      %v2087 = vpop.f32.mrf.mxu0
      %v2088 = vadd.f32 0.0, %v2087
      %2089 = vmatmul.f32.gmra.mxu0 %v2026
      %v2090 = vpop.f32.mrf.mxu0
      %v2091 = vadd.f32 0.0, %v2090
      %2092 = vmatmul.f32.gmra.mxu0 %v2029
      %v2093 = vpop.f32.mrf.mxu0
      %v2094 = vadd.f32 0.0, %v2093
      %2095 = vmatmul.f32.gmra.mxu0 %v2032
      %v2096 = vpop.f32.mrf.mxu0
      %v2097 = vadd.f32 0.0, %v2096
      %2098 = vmatmul.f32.gmra.mxu0 %v2035
      %v2099 = vpop.f32.mrf.mxu0
      %v2100 = vadd.f32 0.0, %v2099
      %2101 = vdwg.mxu0
      %2102 = vmatpush.msra.mxu0 0.0
      %2103 = vmatpush.msra.mxu0 0.0
      %2104 = vmatpush.msra.mxu0 0.0
      %2105 = vmatpush.msra.mxu0 0.0
      %2106 = vmatpush.msra.mxu0 0.0
      %2107 = vmatpush.msra.mxu0 0.0
      %2108 = vmatpush.msra.mxu0 0.0
      %2109 = vmatpush.msra.mxu0 0.0
      %2110 = vmatpush.msra.mxu0 0.0
      %2111 = vmatpush.msra.mxu0 0.0
      %2112 = vmatpush.msra.mxu0 0.0
      %2113 = vmatpush.msra.mxu0 0.0
      %2114 = vmatpush.msra.mxu0 %v1988
      %2115 = vmatpush.msra.mxu0 %v1986
      %2116 = vmatpush.msra.mxu0 %v1984
      %2117 = vmatpush.msra.mxu0 %v1982
      %2118 = vmatmul.f32.gmra.mxu0 %v1990
      %v2119 = vpop.f32.mrf.mxu0
      %v2120 = vadd.f32 0.0, %v2119
      %2121 = vmatmul.f32.gmra.mxu0 %v1993
      %v2122 = vpop.f32.mrf.mxu0
      %v2123 = vadd.f32 0.0, %v2122
      %2124 = vmatmul.f32.gmra.mxu0 %v1996
      %v2125 = vpop.f32.mrf.mxu0
      %v2126 = vadd.f32 0.0, %v2125
      %2127 = vmatmul.f32.gmra.mxu0 %v1999
      %v2128 = vpop.f32.mrf.mxu0
      %v2129 = vadd.f32 0.0, %v2128
      %2130 = vmatmul.f32.gmra.mxu0 %v2002
      %v2131 = vpop.f32.mrf.mxu0
      %v2132 = vadd.f32 0.0, %v2131
      %2133 = vmatmul.f32.gmra.mxu0 %v2005
      %v2134 = vpop.f32.mrf.mxu0
      %v2135 = vadd.f32 0.0, %v2134
      %2136 = vmatmul.f32.gmra.mxu0 %v2008
      %v2137 = vpop.f32.mrf.mxu0
      %v2138 = vadd.f32 0.0, %v2137
      %2139 = vmatmul.f32.gmra.mxu0 %v2011
      %v2140 = vpop.f32.mrf.mxu0
      %v2141 = vadd.f32 0.0, %v2140
      %2142 = vmatmul.f32.gmra.mxu0 %v2014
      %v2143 = vpop.f32.mrf.mxu0
      %v2144 = vadd.f32 0.0, %v2143
      %2145 = vmatmul.f32.gmra.mxu0 %v2017
      %v2146 = vpop.f32.mrf.mxu0
      %v2147 = vadd.f32 0.0, %v2146
      %2148 = vmatmul.f32.gmra.mxu0 %v2020
      %v2149 = vpop.f32.mrf.mxu0
      %v2150 = vadd.f32 0.0, %v2149
      %2151 = vmatmul.f32.gmra.mxu0 %v2023
      %v2152 = vpop.f32.mrf.mxu0
      %v2153 = vadd.f32 0.0, %v2152
      %2154 = vmatmul.f32.gmra.mxu0 %v2026
      %v2155 = vpop.f32.mrf.mxu0
      %v2156 = vadd.f32 0.0, %v2155
      %2157 = vmatmul.f32.gmra.mxu0 %v2029
      %v2158 = vpop.f32.mrf.mxu0
      %v2159 = vadd.f32 0.0, %v2158
      %2160 = vmatmul.f32.gmra.mxu0 %v2032
      %v2161 = vpop.f32.mrf.mxu0
      %v2162 = vadd.f32 0.0, %v2161
      %2163 = vmatmul.f32.gmra.mxu0 %v2035
      %v2164 = vpop.f32.mrf.mxu0
      %v2165 = vadd.f32 0.0, %v2164
      %2166 = vdwg.mxu0
      %v2167 = vadd.f32 %v1931, %v2055
      %v2168 = vadd.f32 %v1932, %v2120
      %v2169 = vadd.f32 %v1933, %v2058
      %v2170 = vadd.f32 %v1934, %v2123
      %v2171 = vadd.f32 %v1935, %v2061
      %v2172 = vadd.f32 %v1936, %v2126
      %v2173 = vadd.f32 %v1937, %v2064
      %v2174 = vadd.f32 %v1938, %v2129
      %v2175 = vadd.f32 %v1939, %v2067
      %v2176 = vadd.f32 %v1940, %v2132
      %v2177 = vadd.f32 %v1941, %v2070
      %v2178 = vadd.f32 %v1942, %v2135
      %v2179 = vadd.f32 %v1943, %v2073
      %v2180 = vadd.f32 %v1944, %v2138
      %v2181 = vadd.f32 %v1945, %v2076
      %v2182 = vadd.f32 %v1946, %v2141
      %v2183 = vadd.f32 %v1947, %v2079
      %v2184 = vadd.f32 %v1948, %v2144
      %v2185 = vadd.f32 %v1949, %v2082
      %v2186 = vadd.f32 %v1950, %v2147
      %v2187 = vadd.f32 %v1951, %v2085
      %v2188 = vadd.f32 %v1952, %v2150
      %v2189 = vadd.f32 %v1953, %v2088
      %v2190 = vadd.f32 %v1954, %v2153
      %v2191 = vadd.f32 %v1955, %v2091
      %v2192 = vadd.f32 %v1956, %v2156
      %v2193 = vadd.f32 %v1957, %v2094
      %v2194 = vadd.f32 %v1958, %v2159
      %v2195 = vadd.f32 %v1959, %v2097
      %v2196 = vadd.f32 %v1960, %v2162
      %v2197 = vadd.f32 %v1961, %v2100
      %v2198 = vadd.f32 %v1962, %v2165
      %s2199 = sadd.s32 %s196, 41
      %s2200 = scalar_lea.vmem %s184, %s2199
      %v2201 = vld [vmem:[%s2200] sm:$0xff]
      %v2202 = vld [vmem:[%s2200 + $0x8] sm:$0xff]
      %v2203 = vld [vmem:[%s2200 + $0x10] sm:$0xff]
      %v2204 = vld [vmem:[%s2200 + $0x18] sm:$0xff]
      %v2205 = vld [vmem:[%s2200 + $0x20] sm:$0xff]
      %v2206 = vld [vmem:[%s2200 + $0x28] sm:$0xff]
      %v2207 = vld [vmem:[%s2200 + $0x30] sm:$0xff]
      %v2208 = vld [vmem:[%s2200 + $0x38] sm:$0xff]
      %v2209 = vld [vmem:[%s2200 + $0x40] sm:$0xff]
      %v2210 = vld [vmem:[%s2200 + $0x48] sm:$0xff]
      %v2211 = vld [vmem:[%s2200 + $0x50] sm:$0xff]
      %v2212 = vld [vmem:[%s2200 + $0x58] sm:$0xff]
      %v2213 = vld [vmem:[%s2200 + $0x60] sm:$0xff]
      %v2214 = vld [vmem:[%s2200 + $0x68] sm:$0xff]
      %v2215 = vld [vmem:[%s2200 + $0x70] sm:$0xff]
      %v2216 = vld [vmem:[%s2200 + $0x78] sm:$0xff]
      %v2217 = vmul.f32 %v2201, %v278
      %v2218 = vmul.f32 %v2202, %v279
      %v2219 = vmul.f32 %v2203, %v280
      %v2220 = vmul.f32 %v2204, %v281
      %v2221 = vmul.f32 %v2205, %v282
      %v2222 = vmul.f32 %v2206, %v283
      %v2223 = vmul.f32 %v2207, %v284
      %v2224 = vmul.f32 %v2208, %v285
      %v2225 = vmul.f32 %v2209, %v286
      %v2226 = vmul.f32 %v2210, %v287
      %v2227 = vmul.f32 %v2211, %v288
      %v2228 = vmul.f32 %v2212, %v289
      %v2229 = vmul.f32 %v2213, %v290
      %v2230 = vmul.f32 %v2214, %v291
      %v2231 = vmul.f32 %v2215, %v292
      %v2232 = vmul.f32 %v2216, %v293
      %v2233 = vld [vmem:[%s1 + $0x200] sm:$0xff]
      %v2234 = vld [vmem:[%s1 + $0x208] sm:$0xff]
      %v2235 = vld [vmem:[%s1 + $0x210] sm:$0xff]
      %v2236 = vld [vmem:[%s1 + $0x218] sm:$0xff]
      %v2237 = vld [vmem:[%s1 + $0x220] sm:$0xff]
      %v2238 = vld [vmem:[%s1 + $0x228] sm:$0xff]
      %v2239 = vld [vmem:[%s1 + $0x230] sm:$0xff]
      %v2240 = vld [vmem:[%s1 + $0x238] sm:$0xff]
      %v2242 = vsel %vm362, %v2217, 0
      %v2245 = vsel %vm362, %v2218, 0
      %v2248 = vsel %vm362, %v2219, 0
      %v2251 = vsel %vm362, %v2220, 0
      %v2254 = vsel %vm362, %v2221, 0
      %v2257 = vsel %vm362, %v2222, 0
      %v2260 = vsel %vm362, %v2223, 0
      %v2263 = vsel %vm362, %v2224, 0
      %v2266 = vsel %vm362, %v2225, 0
      %v2269 = vsel %vm362, %v2226, 0
      %v2272 = vsel %vm362, %v2227, 0
      %v2275 = vsel %vm362, %v2228, 0
      %v2278 = vsel %vm362, %v2229, 0
      %v2281 = vsel %vm362, %v2230, 0
      %v2284 = vsel %vm362, %v2231, 0
      %v2287 = vsel %vm362, %v2232, 0
      %2289 = vmatpush.msra.mxu0 0.0
      %2290 = vmatpush.msra.mxu0 0.0
      %2291 = vmatpush.msra.mxu0 0.0
      %2292 = vmatpush.msra.mxu0 0.0
      %2293 = vmatpush.msra.mxu0 0.0
      %2294 = vmatpush.msra.mxu0 0.0
      %2295 = vmatpush.msra.mxu0 0.0
      %2296 = vmatpush.msra.mxu0 0.0
      %2297 = vmatpush.msra.mxu0 0.0
      %2298 = vmatpush.msra.mxu0 0.0
      %2299 = vmatpush.msra.mxu0 0.0
      %2300 = vmatpush.msra.mxu0 0.0
      %2301 = vmatpush.msra.mxu0 %v2239
      %2302 = vmatpush.msra.mxu0 %v2237
      %2303 = vmatpush.msra.mxu0 %v2235
      %2304 = vmatpush.msra.mxu0 %v2233
      %2305 = vmatmul.f32.gmra.mxu0 %v2242
      %v2306 = vpop.f32.mrf.mxu0
      %v2307 = vadd.f32 0.0, %v2306
      %2308 = vmatmul.f32.gmra.mxu0 %v2245
      %v2309 = vpop.f32.mrf.mxu0
      %v2310 = vadd.f32 0.0, %v2309
      %2311 = vmatmul.f32.gmra.mxu0 %v2248
      %v2312 = vpop.f32.mrf.mxu0
      %v2313 = vadd.f32 0.0, %v2312
      %2314 = vmatmul.f32.gmra.mxu0 %v2251
      %v2315 = vpop.f32.mrf.mxu0
      %v2316 = vadd.f32 0.0, %v2315
      %2317 = vmatmul.f32.gmra.mxu0 %v2254
      %v2318 = vpop.f32.mrf.mxu0
      %v2319 = vadd.f32 0.0, %v2318
      %2320 = vmatmul.f32.gmra.mxu0 %v2257
      %v2321 = vpop.f32.mrf.mxu0
      %v2322 = vadd.f32 0.0, %v2321
      %2323 = vmatmul.f32.gmra.mxu0 %v2260
      %v2324 = vpop.f32.mrf.mxu0
      %v2325 = vadd.f32 0.0, %v2324
      %2326 = vmatmul.f32.gmra.mxu0 %v2263
      %v2327 = vpop.f32.mrf.mxu0
      %v2328 = vadd.f32 0.0, %v2327
      %2329 = vmatmul.f32.gmra.mxu0 %v2266
      %v2330 = vpop.f32.mrf.mxu0
      %v2331 = vadd.f32 0.0, %v2330
      %2332 = vmatmul.f32.gmra.mxu0 %v2269
      %v2333 = vpop.f32.mrf.mxu0
      %v2334 = vadd.f32 0.0, %v2333
      %2335 = vmatmul.f32.gmra.mxu0 %v2272
      %v2336 = vpop.f32.mrf.mxu0
      %v2337 = vadd.f32 0.0, %v2336
      %2338 = vmatmul.f32.gmra.mxu0 %v2275
      %v2339 = vpop.f32.mrf.mxu0
      %v2340 = vadd.f32 0.0, %v2339
      %2341 = vmatmul.f32.gmra.mxu0 %v2278
      %v2342 = vpop.f32.mrf.mxu0
      %v2343 = vadd.f32 0.0, %v2342
      %2344 = vmatmul.f32.gmra.mxu0 %v2281
      %v2345 = vpop.f32.mrf.mxu0
      %v2346 = vadd.f32 0.0, %v2345
      %2347 = vmatmul.f32.gmra.mxu0 %v2284
      %v2348 = vpop.f32.mrf.mxu0
      %v2349 = vadd.f32 0.0, %v2348
      %2350 = vmatmul.f32.gmra.mxu0 %v2287
      %v2351 = vpop.f32.mrf.mxu0
      %v2352 = vadd.f32 0.0, %v2351
      %2353 = vdwg.mxu0
      %2354 = vmatpush.msra.mxu0 0.0
      %2355 = vmatpush.msra.mxu0 0.0
      %2356 = vmatpush.msra.mxu0 0.0
      %2357 = vmatpush.msra.mxu0 0.0
      %2358 = vmatpush.msra.mxu0 0.0
      %2359 = vmatpush.msra.mxu0 0.0
      %2360 = vmatpush.msra.mxu0 0.0
      %2361 = vmatpush.msra.mxu0 0.0
      %2362 = vmatpush.msra.mxu0 0.0
      %2363 = vmatpush.msra.mxu0 0.0
      %2364 = vmatpush.msra.mxu0 0.0
      %2365 = vmatpush.msra.mxu0 0.0
      %2366 = vmatpush.msra.mxu0 %v2240
      %2367 = vmatpush.msra.mxu0 %v2238
      %2368 = vmatpush.msra.mxu0 %v2236
      %2369 = vmatpush.msra.mxu0 %v2234
      %2370 = vmatmul.f32.gmra.mxu0 %v2242
      %v2371 = vpop.f32.mrf.mxu0
      %v2372 = vadd.f32 0.0, %v2371
      %2373 = vmatmul.f32.gmra.mxu0 %v2245
      %v2374 = vpop.f32.mrf.mxu0
      %v2375 = vadd.f32 0.0, %v2374
      %2376 = vmatmul.f32.gmra.mxu0 %v2248
      %v2377 = vpop.f32.mrf.mxu0
      %v2378 = vadd.f32 0.0, %v2377
      %2379 = vmatmul.f32.gmra.mxu0 %v2251
      %v2380 = vpop.f32.mrf.mxu0
      %v2381 = vadd.f32 0.0, %v2380
      %2382 = vmatmul.f32.gmra.mxu0 %v2254
      %v2383 = vpop.f32.mrf.mxu0
      %v2384 = vadd.f32 0.0, %v2383
      %2385 = vmatmul.f32.gmra.mxu0 %v2257
      %v2386 = vpop.f32.mrf.mxu0
      %v2387 = vadd.f32 0.0, %v2386
      %2388 = vmatmul.f32.gmra.mxu0 %v2260
      %v2389 = vpop.f32.mrf.mxu0
      %v2390 = vadd.f32 0.0, %v2389
      %2391 = vmatmul.f32.gmra.mxu0 %v2263
      %v2392 = vpop.f32.mrf.mxu0
      %v2393 = vadd.f32 0.0, %v2392
      %2394 = vmatmul.f32.gmra.mxu0 %v2266
      %v2395 = vpop.f32.mrf.mxu0
      %v2396 = vadd.f32 0.0, %v2395
      %2397 = vmatmul.f32.gmra.mxu0 %v2269
      %v2398 = vpop.f32.mrf.mxu0
      %v2399 = vadd.f32 0.0, %v2398
      %2400 = vmatmul.f32.gmra.mxu0 %v2272
      %v2401 = vpop.f32.mrf.mxu0
      %v2402 = vadd.f32 0.0, %v2401
      %2403 = vmatmul.f32.gmra.mxu0 %v2275
      %v2404 = vpop.f32.mrf.mxu0
      %v2405 = vadd.f32 0.0, %v2404
      %2406 = vmatmul.f32.gmra.mxu0 %v2278
      %v2407 = vpop.f32.mrf.mxu0
      %v2408 = vadd.f32 0.0, %v2407
      %2409 = vmatmul.f32.gmra.mxu0 %v2281
      %v2410 = vpop.f32.mrf.mxu0
      %v2411 = vadd.f32 0.0, %v2410
      %2412 = vmatmul.f32.gmra.mxu0 %v2284
      %v2413 = vpop.f32.mrf.mxu0
      %v2414 = vadd.f32 0.0, %v2413
      %2415 = vmatmul.f32.gmra.mxu0 %v2287
      %v2416 = vpop.f32.mrf.mxu0
      %v2417 = vadd.f32 0.0, %v2416
      %2418 = vdwg.mxu0
      %v2419 = vadd.f32 %v2167, %v2307
      %v2420 = vadd.f32 %v2168, %v2372
      %v2421 = vadd.f32 %v2169, %v2310
      %v2422 = vadd.f32 %v2170, %v2375
      %v2423 = vadd.f32 %v2171, %v2313
      %v2424 = vadd.f32 %v2172, %v2378
      %v2425 = vadd.f32 %v2173, %v2316
      %v2426 = vadd.f32 %v2174, %v2381
      %v2427 = vadd.f32 %v2175, %v2319
      %v2428 = vadd.f32 %v2176, %v2384
      %v2429 = vadd.f32 %v2177, %v2322
      %v2430 = vadd.f32 %v2178, %v2387
      %v2431 = vadd.f32 %v2179, %v2325
      %v2432 = vadd.f32 %v2180, %v2390
      %v2433 = vadd.f32 %v2181, %v2328
      %v2434 = vadd.f32 %v2182, %v2393
      %v2435 = vadd.f32 %v2183, %v2331
      %v2436 = vadd.f32 %v2184, %v2396
      %v2437 = vadd.f32 %v2185, %v2334
      %v2438 = vadd.f32 %v2186, %v2399
      %v2439 = vadd.f32 %v2187, %v2337
      %v2440 = vadd.f32 %v2188, %v2402
      %v2441 = vadd.f32 %v2189, %v2340
      %v2442 = vadd.f32 %v2190, %v2405
      %v2443 = vadd.f32 %v2191, %v2343
      %v2444 = vadd.f32 %v2192, %v2408
      %v2445 = vadd.f32 %v2193, %v2346
      %v2446 = vadd.f32 %v2194, %v2411
      %v2447 = vadd.f32 %v2195, %v2349
      %v2448 = vadd.f32 %v2196, %v2414
      %v2449 = vadd.f32 %v2197, %v2352
      %v2450 = vadd.f32 %v2198, %v2417
      %v2451 = vld [vmem:[%s2] sm:$0x3]
      %v2453 = vperm.slane %v2451, 0
      %v2454 = vperm.slane %v2451, 1
      %v2457 = vadd.f32 %v2419, %v2453
      %v2458 = vadd.f32 %v2420, %v2454
      %v2459 = vadd.f32 %v2421, %v2453
      %v2460 = vadd.f32 %v2422, %v2454
      %v2461 = vadd.f32 %v2423, %v2453
      %v2462 = vadd.f32 %v2424, %v2454
      %v2463 = vadd.f32 %v2425, %v2453
      %v2464 = vadd.f32 %v2426, %v2454
      %v2465 = vadd.f32 %v2427, %v2453
      %v2466 = vadd.f32 %v2428, %v2454
      %v2467 = vadd.f32 %v2429, %v2453
      %v2468 = vadd.f32 %v2430, %v2454
      %v2469 = vadd.f32 %v2431, %v2453
      %v2470 = vadd.f32 %v2432, %v2454
      %v2471 = vadd.f32 %v2433, %v2453
      %v2472 = vadd.f32 %v2434, %v2454
      %v2473 = vadd.f32 %v2435, %v2453
      %v2474 = vadd.f32 %v2436, %v2454
      %v2475 = vadd.f32 %v2437, %v2453
      %v2476 = vadd.f32 %v2438, %v2454
      %v2477 = vadd.f32 %v2439, %v2453
      %v2478 = vadd.f32 %v2440, %v2454
      %v2479 = vadd.f32 %v2441, %v2453
      %v2480 = vadd.f32 %v2442, %v2454
      %v2481 = vadd.f32 %v2443, %v2453
      %v2482 = vadd.f32 %v2444, %v2454
      %v2483 = vadd.f32 %v2445, %v2453
      %v2484 = vadd.f32 %v2446, %v2454
      %v2485 = vadd.f32 %v2447, %v2453
      %v2486 = vadd.f32 %v2448, %v2454
      %v2487 = vadd.f32 %v2449, %v2453
      %v2488 = vadd.f32 %v2450, %v2454
      %2489 = vst [vmem:[%s194] sm:$0xff] %v2457
      %2490 = vst [vmem:[%s194 + $0x8] sm:$0xff] %v2458
      %2491 = vst [vmem:[%s194 + $0x10] sm:$0xff] %v2459
      %2492 = vst [vmem:[%s194 + $0x18] sm:$0xff] %v2460
      %2493 = vst [vmem:[%s194 + $0x20] sm:$0xff] %v2461
      %2494 = vst [vmem:[%s194 + $0x28] sm:$0xff] %v2462
      %2495 = vst [vmem:[%s194 + $0x30] sm:$0xff] %v2463
      %2496 = vst [vmem:[%s194 + $0x38] sm:$0xff] %v2464
      %2497 = vst [vmem:[%s194 + $0x40] sm:$0xff] %v2465
      %2498 = vst [vmem:[%s194 + $0x48] sm:$0xff] %v2466
      %2499 = vst [vmem:[%s194 + $0x50] sm:$0xff] %v2467
      %2500 = vst [vmem:[%s194 + $0x58] sm:$0xff] %v2468
      %2501 = vst [vmem:[%s194 + $0x60] sm:$0xff] %v2469
      %2502 = vst [vmem:[%s194 + $0x68] sm:$0xff] %v2470
      %2503 = vst [vmem:[%s194 + $0x70] sm:$0xff] %v2471
      %2504 = vst [vmem:[%s194 + $0x78] sm:$0xff] %v2472
      %2505 = vst [vmem:[%s194 + $0x80] sm:$0xff] %v2473
      %2506 = vst [vmem:[%s194 + $0x88] sm:$0xff] %v2474
      %2507 = vst [vmem:[%s194 + $0x90] sm:$0xff] %v2475
      %2508 = vst [vmem:[%s194 + $0x98] sm:$0xff] %v2476
      %2509 = vst [vmem:[%s194 + $0xa0] sm:$0xff] %v2477
      %2510 = vst [vmem:[%s194 + $0xa8] sm:$0xff] %v2478
      %2511 = vst [vmem:[%s194 + $0xb0] sm:$0xff] %v2479
      %2512 = vst [vmem:[%s194 + $0xb8] sm:$0xff] %v2480
      %2513 = vst [vmem:[%s194 + $0xc0] sm:$0xff] %v2481
      %2514 = vst [vmem:[%s194 + $0xc8] sm:$0xff] %v2482
      %2515 = vst [vmem:[%s194 + $0xd0] sm:$0xff] %v2483
      %2516 = vst [vmem:[%s194 + $0xd8] sm:$0xff] %v2484
      %2517 = vst [vmem:[%s194 + $0xe0] sm:$0xff] %v2485
      %2518 = vst [vmem:[%s194 + $0xe8] sm:$0xff] %v2486
      %2519 = vst [vmem:[%s194 + $0xf0] sm:$0xff] %v2487
      %2520 = vst [vmem:[%s194 + $0xf8] sm:$0xff] %v2488
      %s2521 = smul.u32 16, %s19
      %p2522 = scmp.lt.s32.totalorder %s18, 1
      %s2523 = scalar_select %p2522, %s18, 1
      %p2524 = scmp.lt.s32.totalorder %s2521, 31
      %s2525 = scalar_select %p2524, %s2521, 31
      %s2526 = smul.addr %s2525, 2
      %s2527 = smul.addr %s2523, 64
      %s2528 = sadd.s32 %s2526, %s2527
      %s2529 = smul.addr %s2528, 8
      %s2530 = scalar_lea.vmem %s3, %s2529
      // Predicated region
      $region33: #{upblock_forward.1} parent=31 // pred_check
        %p2531 = pneg %p114
      $region34: #{upblock_forward.1} parent=31 // pred_check_branch
        %2533 = sbr.rel (%p2531) target = $region36
      $region35: #{upblock_forward.1} parent=31 // pred_region
        %s2534 = smul.u32 16, %s19
      $region36: #{upblock_forward.1} parent=31 // pred_fallthru
        _
    $region32: #{upblock_forward.1} parent=5 // pred_fallthru
      _
    %p2535 = scmp.le.s32.totalorder 2, %s9
    // Predicated region
    $region37: #{upblock_forward.1} parent=5 // pred_check
      %p2536 = pneg %p2535
    $region38: #{upblock_forward.1} parent=5 // pred_check_branch
      %2538 = sbr.rel (%p2536) target = $region40
    $region39: #{upblock_forward.1} parent=5 // pred_region
      %s2539 = ssub.s32 %s9, 2
      // Predicated region
      $region41: #{upblock_forward.1} parent=39 // pred_check
        %p2540 = pneg %p120
      $region42: #{upblock_forward.1} parent=39 // pred_check_branch
        %2542 = sbr.rel (%p2540) target = $region44
      $region43: #{upblock_forward.1} parent=39 // pred_region
        %s2543 = smul.u32 16, %s21
        %p2544 = scmp.lt.s32.totalorder %s20, 1
        %s2545 = scalar_select %p2544, %s20, 1
        %p2546 = scmp.lt.s32.totalorder %s2543, 31
        %s2547 = scalar_select %p2546, %s2543, 31
        %s2548 = smul.addr %s2547, 2
        %s2549 = smul.addr %s2545, 64
        %s2550 = sadd.s32 %s2548, %s2549
        %s2551 = smul.addr %s2550, 8
        %s2552 = scalar_lea.vmem %s3, %s2551
      $region44: #{upblock_forward.1} parent=39 // pred_fallthru
        _
    $region40: #{upblock_forward.1} parent=5 // pred_fallthru
      _
  $region6: #{upblock_forward.1} parent=0 // loop_footer
    %s13 = sadd.s32 1, %s9
  $region7: #{upblock_forward.1} parent=0 // loop_footer_branch
    %8 = sbr.rel target = $region3
  $region8: #{upblock_forward.1} parent=0 // loop_exit
    _

</llo_original>
